<compile_context>
chip_gen: v7x
topology: tpu7x:2x2x1
jax: 0.10.0
libtpu: 0.0.40
codegen_flags: <defaults>
</compile_context>

<pallas_src>
import functools

import jax
import jax.numpy as jnp
from jax.experimental import pallas as pl
from jax.experimental.pallas import tpu as pltpu

HEAD_WIDTH = 128        # lane-dense fused head / padded output width
MAX_BATCH_TILE = 1024   # max rows per grid step (amortizes per-step + MXU latency)


def _cdiv(a, b):
    return (a + b - 1) // b


def _round_up(a, m):
    return _cdiv(a, m) * m


def _dueling_dqn_kernel(
    x_ref,
    # feature MLP: in -> 256 -> 256 -> 512
    fw1, fb1, fw2, fb2, fw3, fb3,
    # fused value+advantage stream (block-diagonal): 512 -> 512 -> 256 -> 256
    sw1, sb1, sw2, sb2, sw3, sb3,
    # fused head: 256 -> 128 (col 0 = V, cols 1..output_dim = A, rest zero)
    hw, hb,
    # output (padded, lane-dense)
    q_ref,
    *,
    inv_output_dim,
):
    def linear_relu_bf16(h, w_ref, b_ref):
        y = jnp.dot(h, w_ref[...], preferred_element_type=jnp.float32) + b_ref[...]
        return jnp.maximum(y, 0.0).astype(jnp.bfloat16)

    # Accept bf16 input directly (no cast pass); cast only if caller gave f32.
    x = x_ref[...]
    if x.dtype != jnp.bfloat16:
        x = x.astype(jnp.bfloat16)

    # feature extractor
    h = linear_relu_bf16(x, fw1, fb1)
    h = linear_relu_bf16(h, fw2, fb2)
    feats = linear_relu_bf16(h, fw3, fb3)

    # fused value/advantage stream: [V|A] kept side by side in the lanes
    s = linear_relu_bf16(feats, sw1, sb1)   # (B, 512) = [v:256 | a:256]
    s = linear_relu_bf16(s, sw2, sb2)       # (B, 256) = [v:128 | a:128]
    s = linear_relu_bf16(s, sw3, sb3)       # (B, 256) = [v:128 | a:128]

    # fused lane-dense head (no ReLU): f32 result
    head = jnp.dot(s, hw[...], preferred_element_type=jnp.float32) + hb[...]

    value = head[:, 0:1]                                       # (B, 1)
    # padded columns are exactly zero, so sum(head) = value + sum(advantage)
    adv_sum = jnp.sum(head, axis=1, keepdims=True) - value
    adv_mean = adv_sum * inv_output_dim
    # q (valid in columns 1..output_dim) = A + V - mean(A); wrapper slices.
    q_ref[...] = head + (value - adv_mean)


def _choose_batch_tiling(batch):
    """Balanced batch tiling.

    - round batch up to a multiple of 16 rows (bf16 sublane packing),
    - split into >= 2 tiles whenever there are >= 32 rows (keeps both v7x
      TensorCores busy under dimension_semantics=("parallel",)),
    - cap tiles at MAX_BATCH_TILE rows,
    - per-tile padding waste bounded by < 16 rows (no round-up to a full
      multiple of the max tile).
    """
    pb16 = _round_up(max(batch, 1), 16)
    num_tiles = _cdiv(pb16, MAX_BATCH_TILE)
    if pb16 >= 32:
        num_tiles = max(num_tiles, 2)
    b_tile = _round_up(_cdiv(pb16, num_tiles), 16)
    return b_tile, num_tiles


@functools.partial(jax.jit, static_argnames=("output_dim",))
def dueling_dqn_forward(x, packed_params, output_dim):
    batch, in_dim = x.shape

    b_tile, num_tiles = _choose_batch_tiling(batch)
    pb = b_tile * num_tiles
    if pb != batch:
        x = jnp.pad(x, ((0, pb - batch), (0, 0)))

    flat = [p for pair in packed_params for p in pair]
    # Constant operands: full-array block, constant index_map, single-buffered
    # (no re-DMA across grid steps, half the VMEM of the default 2-deep pipe).
    weight_specs = [
        pl.BlockSpec(p.shape, lambda i: (0, 0), pipeline_mode=pl.Buffered(1))
        for p in flat
    ]

    kernel = functools.partial(
        _dueling_dqn_kernel, inv_output_dim=1.0 / float(output_dim)
    )

    q_pad = pl.pallas_call(
        kernel,
        out_shape=jax.ShapeDtypeStruct((pb, HEAD_WIDTH), jnp.float32),
        grid=(num_tiles,),
        in_specs=[pl.BlockSpec((b_tile, in_dim), lambda i: (i, 0))] + weight_specs,
        out_specs=pl.BlockSpec((b_tile, HEAD_WIDTH), lambda i: (i, 0)),
        compiler_params=pltpu.CompilerParams(
            dimension_semantics=("parallel",),
            # Working set: ~1.5 MiB weights (single-buffered) + streamed x/q
            # tiles + <= (1024, 512) f32 temporaries  =>  well under 32 MiB.
            # Leaves headroom on v7x (64 MiB physical VMEM per TC).
            vmem_limit_bytes=32 * 1024 * 1024,
        ),
    )(x, *flat)

    return q_pad[:batch, 1:1 + output_dim]


def init_params(key, input_dim, output_dim):
    """Deterministic synthetic parameters (unfused, f32).

    Each Linear(d_in, d_out) is stored as (W: (d_in, d_out), b: (1, d_out)).
    """
    dims = [
        # feature
        (input_dim, 256), (256, 256), (256, 512),
        # value stream
        (512, 256), (256, 128), (128, 128), (128, 1),
        # advantage stream
        (512, 256), (256, 128), (128, 128), (128, output_dim),
    ]
    params = []
    for d_in, d_out in dims:
        key, kw, kb = jax.random.split(key, 3)
        scale = 1.0 / jnp.sqrt(jnp.float32(d_in))
        w = jax.random.uniform(kw, (d_in, d_out), jnp.float32, -scale, scale)
        b = jax.random.uniform(kb, (1, d_out), jnp.float32, -scale, scale)
        params.append((w, b))
    return params


def pack_params(params, output_dim):
    """Fuse value/advantage streams into block-diagonal bf16 weights.

    Returns 7 (W, b) pairs: 3 feature layers, 3 fused-stream layers, 1 fused
    lane-dense head. Weights are bf16, biases stay f32.

    Invariant: head columns (output_dim + 1) .. HEAD_WIDTH-1 must be exactly
    zero (weights AND bias) — the in-kernel dueling mean relies on it.
    """
    assert output_dim + 1 <= HEAD_WIDTH
    (fw1, fb1), (fw2, fb2), (fw3, fb3) = params[0:3]
    (vw1, vb1), (vw2, vb2), (vw3, vb3), (vw4, vb4) = params[3:7]
    (aw1, ab1), (aw2, ab2), (aw3, ab3), (aw4, ab4) = params[7:11]

    def block_diag(wa, wb):
        top = jnp.concatenate(
            [wa, jnp.zeros((wa.shape[0], wb.shape[1]), wa.dtype)], axis=1)
        bot = jnp.concatenate(
            [jnp.zeros((wb.shape[0], wa.shape[1]), wb.dtype), wb], axis=1)
        return jnp.concatenate([top, bot], axis=0)

    sw1 = jnp.concatenate([vw1, aw1], axis=1)            # (512, 512)
    sb1 = jnp.concatenate([vb1, ab1], axis=1)            # (1, 512)
    sw2 = block_diag(vw2, aw2)                           # (512, 256)
    sb2 = jnp.concatenate([vb2, ab2], axis=1)            # (1, 256)
    sw3 = block_diag(vw3, aw3)                           # (256, 256)
    sb3 = jnp.concatenate([vb3, ab3], axis=1)            # (1, 256)

    hw = jnp.zeros((256, HEAD_WIDTH), jnp.float32)
    hw = hw.at[0:128, 0:1].set(vw4)                      # value column
    hw = hw.at[128:256, 1:1 + output_dim].set(aw4)       # advantage columns
    hb = jnp.zeros((1, HEAD_WIDTH), jnp.float32)
    hb = hb.at[0, 0:1].set(vb4[0])
    hb = hb.at[0, 1:1 + output_dim].set(ab4[0])

    # Defensively enforce the zero-padding invariant (guards future loaders
    # that might overwrite these columns with non-zero values).
    hw = hw.at[:, 1 + output_dim:].set(0.0)
    hb = hb.at[:, 1 + output_dim:].set(0.0)

    bf = lambda w: w.astype(jnp.bfloat16)
    return [
        (bf(fw1), fb1), (bf(fw2), fb2), (bf(fw3), fb3),
        (bf(sw1), sb1), (bf(sw2), sb2), (bf(sw3), sb3),
        (bf(hw), hb),
    ]


def reference_forward(x, params):
    """Unfused reference emulating the kernel's bf16-in / f32-accum numerics."""
    def linear(h, wb, relu):
        w, b = wb
        y = jnp.dot(h.astype(jnp.bfloat16), w.astype(jnp.bfloat16),
                    preferred_element_type=jnp.float32) + b
        return jnp.maximum(y, 0.0) if relu else y

    h = x
    for i in range(3):
        h = linear(h, params[i], True)
    v = h
    for i in range(3, 6):
        v = linear(v, params[i], True)
    value = linear(v, params[6], False)
    a = h
    for i in range(7, 10):
        a = linear(a, params[i], True)
    adv = linear(a, params[10], False)
    return value + (adv - jnp.mean(adv, axis=1, keepdims=True))


if __name__ == "__main__":
    input_dim = 32
    output_dim = 8
    batch = 2

    key = jax.random.PRNGKey(0)
    kx, kp = jax.random.split(key)
    x = jax.random.normal(kx, (batch, input_dim), jnp.float32)

    params = init_params(kp, input_dim, output_dim)
    packed = pack_params(params, output_dim)

    q = dueling_dqn_forward(x, packed, output_dim)
    q = jax.block_until_ready(q)

    q_ref = reference_forward(x, params)
    assert q.shape == (batch, output_dim)
    assert jnp.allclose(q, q_ref, atol=5e-3, rtol=5e-3), (
        f"max err {jnp.max(jnp.abs(q - q_ref))}"
    )
    print("KERNEL_OK")
</pallas_src>

<mosaic_0001>
module attributes {stable_mosaic.version = 11 : i64} {
  func.func @_dueling_dqn_kernel(%arg0: i32, %arg1: memref<16x32xf32, #tpu.memory_space<vmem>>, %arg2: memref<32x256xbf16, #tpu.memory_space<vmem>>, %arg3: memref<1x256xf32, #tpu.memory_space<vmem>>, %arg4: memref<256x256xbf16, #tpu.memory_space<vmem>>, %arg5: memref<1x256xf32, #tpu.memory_space<vmem>>, %arg6: memref<256x512xbf16, #tpu.memory_space<vmem>>, %arg7: memref<1x512xf32, #tpu.memory_space<vmem>>, %arg8: memref<512x512xbf16, #tpu.memory_space<vmem>>, %arg9: memref<1x512xf32, #tpu.memory_space<vmem>>, %arg10: memref<512x256xbf16, #tpu.memory_space<vmem>>, %arg11: memref<1x256xf32, #tpu.memory_space<vmem>>, %arg12: memref<256x256xbf16, #tpu.memory_space<vmem>>, %arg13: memref<1x256xf32, #tpu.memory_space<vmem>>, %arg14: memref<256x128xbf16, #tpu.memory_space<vmem>>, %arg15: memref<1x128xf32, #tpu.memory_space<vmem>>, %arg16: memref<16x128xf32, #tpu.memory_space<vmem>>) attributes {dimension_semantics = [#tpu.dimension_semantics<parallel>], iteration_bounds = array<i64: 1>, scalar_prefetch = 0 : i64, scratch_operands = 0 : i64, tpu.core_type = #tpu.core_type<tc>, window_params = [{transform_indices = @transform_0, window_bounds = array<i64: 16, 32>}, {pipeline_mode = #tpu.pipeline_mode<synchronous>, transform_indices = @transform_1, window_bounds = array<i64: 32, 256>}, {pipeline_mode = #tpu.pipeline_mode<synchronous>, transform_indices = @transform_2, window_bounds = array<i64: 1, 256>}, {pipeline_mode = #tpu.pipeline_mode<synchronous>, transform_indices = @transform_3, window_bounds = array<i64: 256, 256>}, {pipeline_mode = #tpu.pipeline_mode<synchronous>, transform_indices = @transform_4, window_bounds = array<i64: 1, 256>}, {pipeline_mode = #tpu.pipeline_mode<synchronous>, transform_indices = @transform_5, window_bounds = array<i64: 256, 512>}, {pipeline_mode = #tpu.pipeline_mode<synchronous>, transform_indices = @transform_6, window_bounds = array<i64: 1, 512>}, {pipeline_mode = #tpu.pipeline_mode<synchronous>, transform_indices = @transform_7, window_bounds = array<i64: 512, 512>}, {pipeline_mode = #tpu.pipeline_mode<synchronous>, transform_indices = @transform_8, window_bounds = array<i64: 1, 512>}, {pipeline_mode = #tpu.pipeline_mode<synchronous>, transform_indices = @transform_9, window_bounds = array<i64: 512, 256>}, {pipeline_mode = #tpu.pipeline_mode<synchronous>, transform_indices = @transform_10, window_bounds = array<i64: 1, 256>}, {pipeline_mode = #tpu.pipeline_mode<synchronous>, transform_indices = @transform_11, window_bounds = array<i64: 256, 256>}, {pipeline_mode = #tpu.pipeline_mode<synchronous>, transform_indices = @transform_12, window_bounds = array<i64: 1, 256>}, {pipeline_mode = #tpu.pipeline_mode<synchronous>, transform_indices = @transform_13, window_bounds = array<i64: 256, 128>}, {pipeline_mode = #tpu.pipeline_mode<synchronous>, transform_indices = @transform_14, window_bounds = array<i64: 1, 128>}, {transform_indices = @transform_15, window_bounds = array<i64: 16, 128>}]} {
    %c0 = arith.constant 0 : index
    %c0_0 = arith.constant 0 : index
    %0 = vector.load %arg1[%c0, %c0_0] : memref<16x32xf32, #tpu.memory_space<vmem>>, vector<16x32xf32>
    %1 = arith.truncf %0 : vector<16x32xf32> to vector<16x32xbf16>
    %c0_1 = arith.constant 0 : index
    %c0_2 = arith.constant 0 : index
    %2 = vector.load %arg2[%c0_1, %c0_2] : memref<32x256xbf16, #tpu.memory_space<vmem>>, vector<32x256xbf16>
    %cst = arith.constant dense<0.000000e+00> : vector<16x256xf32>
    %3 = tpu.matmul %1, %2, %cst {dimension_numbers = #tpu.dot_dimension_numbers<[1], [0], [0], [1], [0, 0, 1, 1], [], []>} : vector<16x32xbf16>, vector<32x256xbf16>, vector<16x256xf32> -> vector<16x256xf32>
    %c0_3 = arith.constant 0 : index
    %c0_4 = arith.constant 0 : index
    %4 = vector.load %arg3[%c0_3, %c0_4] : memref<1x256xf32, #tpu.memory_space<vmem>>, vector<1x256xf32>
    %5 = vector.broadcast %4 : vector<1x256xf32> to vector<16x256xf32>
    %6 = arith.addf %3, %5 : vector<16x256xf32>
    %cst_5 = arith.constant 0.000000e+00 : f32
    %7 = vector.broadcast %cst_5 : f32 to vector<16x256xf32>
    %8 = arith.maximumf %6, %7 : vector<16x256xf32>
    %9 = arith.truncf %8 : vector<16x256xf32> to vector<16x256xbf16>
    %c0_6 = arith.constant 0 : index
    %c0_7 = arith.constant 0 : index
    %10 = vector.load %arg4[%c0_6, %c0_7] : memref<256x256xbf16, #tpu.memory_space<vmem>>, vector<256x256xbf16>
    %cst_8 = arith.constant dense<0.000000e+00> : vector<16x256xf32>
    %11 = tpu.matmul %9, %10, %cst_8 {dimension_numbers = #tpu.dot_dimension_numbers<[1], [0], [0], [1], [0, 0, 1, 1], [], []>} : vector<16x256xbf16>, vector<256x256xbf16>, vector<16x256xf32> -> vector<16x256xf32>
    %c0_9 = arith.constant 0 : index
    %c0_10 = arith.constant 0 : index
    %12 = vector.load %arg5[%c0_9, %c0_10] : memref<1x256xf32, #tpu.memory_space<vmem>>, vector<1x256xf32>
    %13 = vector.broadcast %12 : vector<1x256xf32> to vector<16x256xf32>
    %14 = arith.addf %11, %13 : vector<16x256xf32>
    %cst_11 = arith.constant 0.000000e+00 : f32
    %15 = vector.broadcast %cst_11 : f32 to vector<16x256xf32>
    %16 = arith.maximumf %14, %15 : vector<16x256xf32>
    %17 = arith.truncf %16 : vector<16x256xf32> to vector<16x256xbf16>
    %c0_12 = arith.constant 0 : index
    %c0_13 = arith.constant 0 : index
    %18 = vector.load %arg6[%c0_12, %c0_13] : memref<256x512xbf16, #tpu.memory_space<vmem>>, vector<256x512xbf16>
    %cst_14 = arith.constant dense<0.000000e+00> : vector<16x512xf32>
    %19 = tpu.matmul %17, %18, %cst_14 {dimension_numbers = #tpu.dot_dimension_numbers<[1], [0], [0], [1], [0, 0, 1, 1], [], []>} : vector<16x256xbf16>, vector<256x512xbf16>, vector<16x512xf32> -> vector<16x512xf32>
    %c0_15 = arith.constant 0 : index
    %c0_16 = arith.constant 0 : index
    %20 = vector.load %arg7[%c0_15, %c0_16] : memref<1x512xf32, #tpu.memory_space<vmem>>, vector<1x512xf32>
    %21 = vector.broadcast %20 : vector<1x512xf32> to vector<16x512xf32>
    %22 = arith.addf %19, %21 : vector<16x512xf32>
    %cst_17 = arith.constant 0.000000e+00 : f32
    %23 = vector.broadcast %cst_17 : f32 to vector<16x512xf32>
    %24 = arith.maximumf %22, %23 : vector<16x512xf32>
    %25 = arith.truncf %24 : vector<16x512xf32> to vector<16x512xbf16>
    %c0_18 = arith.constant 0 : index
    %c0_19 = arith.constant 0 : index
    %26 = vector.load %arg8[%c0_18, %c0_19] : memref<512x512xbf16, #tpu.memory_space<vmem>>, vector<512x512xbf16>
    %cst_20 = arith.constant dense<0.000000e+00> : vector<16x512xf32>
    %27 = tpu.matmul %25, %26, %cst_20 {dimension_numbers = #tpu.dot_dimension_numbers<[1], [0], [0], [1], [0, 0, 1, 1], [], []>} : vector<16x512xbf16>, vector<512x512xbf16>, vector<16x512xf32> -> vector<16x512xf32>
    %c0_21 = arith.constant 0 : index
    %c0_22 = arith.constant 0 : index
    %28 = vector.load %arg9[%c0_21, %c0_22] : memref<1x512xf32, #tpu.memory_space<vmem>>, vector<1x512xf32>
    %29 = vector.broadcast %28 : vector<1x512xf32> to vector<16x512xf32>
    %30 = arith.addf %27, %29 : vector<16x512xf32>
    %cst_23 = arith.constant 0.000000e+00 : f32
    %31 = vector.broadcast %cst_23 : f32 to vector<16x512xf32>
    %32 = arith.maximumf %30, %31 : vector<16x512xf32>
    %33 = arith.truncf %32 : vector<16x512xf32> to vector<16x512xbf16>
    %c0_24 = arith.constant 0 : index
    %c0_25 = arith.constant 0 : index
    %34 = vector.load %arg10[%c0_24, %c0_25] : memref<512x256xbf16, #tpu.memory_space<vmem>>, vector<512x256xbf16>
    %cst_26 = arith.constant dense<0.000000e+00> : vector<16x256xf32>
    %35 = tpu.matmul %33, %34, %cst_26 {dimension_numbers = #tpu.dot_dimension_numbers<[1], [0], [0], [1], [0, 0, 1, 1], [], []>} : vector<16x512xbf16>, vector<512x256xbf16>, vector<16x256xf32> -> vector<16x256xf32>
    %c0_27 = arith.constant 0 : index
    %c0_28 = arith.constant 0 : index
    %36 = vector.load %arg11[%c0_27, %c0_28] : memref<1x256xf32, #tpu.memory_space<vmem>>, vector<1x256xf32>
    %37 = vector.broadcast %36 : vector<1x256xf32> to vector<16x256xf32>
    %38 = arith.addf %35, %37 : vector<16x256xf32>
    %cst_29 = arith.constant 0.000000e+00 : f32
    %39 = vector.broadcast %cst_29 : f32 to vector<16x256xf32>
    %40 = arith.maximumf %38, %39 : vector<16x256xf32>
    %41 = arith.truncf %40 : vector<16x256xf32> to vector<16x256xbf16>
    %c0_30 = arith.constant 0 : index
    %c0_31 = arith.constant 0 : index
    %42 = vector.load %arg12[%c0_30, %c0_31] : memref<256x256xbf16, #tpu.memory_space<vmem>>, vector<256x256xbf16>
    %cst_32 = arith.constant dense<0.000000e+00> : vector<16x256xf32>
    %43 = tpu.matmul %41, %42, %cst_32 {dimension_numbers = #tpu.dot_dimension_numbers<[1], [0], [0], [1], [0, 0, 1, 1], [], []>} : vector<16x256xbf16>, vector<256x256xbf16>, vector<16x256xf32> -> vector<16x256xf32>
    %c0_33 = arith.constant 0 : index
    %c0_34 = arith.constant 0 : index
    %44 = vector.load %arg13[%c0_33, %c0_34] : memref<1x256xf32, #tpu.memory_space<vmem>>, vector<1x256xf32>
    %45 = vector.broadcast %44 : vector<1x256xf32> to vector<16x256xf32>
    %46 = arith.addf %43, %45 : vector<16x256xf32>
    %cst_35 = arith.constant 0.000000e+00 : f32
    %47 = vector.broadcast %cst_35 : f32 to vector<16x256xf32>
    %48 = arith.maximumf %46, %47 : vector<16x256xf32>
    %49 = arith.truncf %48 : vector<16x256xf32> to vector<16x256xbf16>
    %c0_36 = arith.constant 0 : index
    %c0_37 = arith.constant 0 : index
    %50 = vector.load %arg14[%c0_36, %c0_37] : memref<256x128xbf16, #tpu.memory_space<vmem>>, vector<256x128xbf16>
    %cst_38 = arith.constant dense<0.000000e+00> : vector<16x128xf32>
    %51 = tpu.matmul %49, %50, %cst_38 {dimension_numbers = #tpu.dot_dimension_numbers<[1], [0], [0], [1], [0, 0, 1, 1], [], []>} : vector<16x256xbf16>, vector<256x128xbf16>, vector<16x128xf32> -> vector<16x128xf32>
    %c0_39 = arith.constant 0 : index
    %c0_40 = arith.constant 0 : index
    %52 = vector.load %arg15[%c0_39, %c0_40] : memref<1x128xf32, #tpu.memory_space<vmem>>, vector<1x128xf32>
    %53 = vector.broadcast %52 : vector<1x128xf32> to vector<16x128xf32>
    %54 = arith.addf %51, %53 : vector<16x128xf32>
    %55 = vector.extract_strided_slice %54 {offsets = [0, 0], sizes = [16, 1], strides = [1, 1]} : vector<16x128xf32> to vector<16x1xf32>
    %cst_41 = arith.constant dense<0.000000e+00> : vector<16xf32>
    %56 = vector.multi_reduction <add>, %54, %cst_41 [1] : vector<16x128xf32> to vector<16xf32>
    %57 = vector.shape_cast %56 : vector<16xf32> to vector<16x1xf32>
    %58 = arith.subf %57, %55 : vector<16x1xf32>
    %cst_42 = arith.constant 1.250000e-01 : f32
    %59 = vector.broadcast %cst_42 : f32 to vector<16x1xf32>
    %60 = arith.mulf %58, %59 : vector<16x1xf32>
    %61 = arith.subf %55, %60 : vector<16x1xf32>
    %62 = vector.broadcast %61 : vector<16x1xf32> to vector<16x128xf32>
    %63 = arith.addf %54, %62 : vector<16x128xf32>
    %c0_43 = arith.constant 0 : index
    %c0_44 = arith.constant 0 : index
    %64 = vector.load %arg16[%c0_43, %c0_44] : memref<16x128xf32, #tpu.memory_space<vmem>>, vector<16x128xf32>
    tpu.vector_store %arg16[%c0_43, %c0_44], %63 {strides = array<i32>} : memref<16x128xf32, #tpu.memory_space<vmem>>, vector<16x128xf32>,
    return
  }
  func.func @transform_0(%arg0: i32) -> (i32, i32) {
    %c0_i32 = arith.constant 0 : i32
    %c0_i32_0 = arith.constant 0 : i32
    return %arg0, %c0_i32 : i32, i32
  }
  func.func @transform_1(%arg0: i32) -> (i32, i32) {
    %c0_i32 = arith.constant 0 : i32
    %c0_i32_0 = arith.constant 0 : i32
    %c0_i32_1 = arith.constant 0 : i32
    return %c0_i32, %c0_i32_0 : i32, i32
  }
  func.func @transform_2(%arg0: i32) -> (i32, i32) {
    %c0_i32 = arith.constant 0 : i32
    %c0_i32_0 = arith.constant 0 : i32
    %c0_i32_1 = arith.constant 0 : i32
    return %c0_i32, %c0_i32_0 : i32, i32
  }
  func.func @transform_3(%arg0: i32) -> (i32, i32) {
    %c0_i32 = arith.constant 0 : i32
    %c0_i32_0 = arith.constant 0 : i32
    %c0_i32_1 = arith.constant 0 : i32
    return %c0_i32, %c0_i32_0 : i32, i32
  }
  func.func @transform_4(%arg0: i32) -> (i32, i32) {
    %c0_i32 = arith.constant 0 : i32
    %c0_i32_0 = arith.constant 0 : i32
    %c0_i32_1 = arith.constant 0 : i32
    return %c0_i32, %c0_i32_0 : i32, i32
  }
  func.func @transform_5(%arg0: i32) -> (i32, i32) {
    %c0_i32 = arith.constant 0 : i32
    %c0_i32_0 = arith.constant 0 : i32
    %c0_i32_1 = arith.constant 0 : i32
    return %c0_i32, %c0_i32_0 : i32, i32
  }
  func.func @transform_6(%arg0: i32) -> (i32, i32) {
    %c0_i32 = arith.constant 0 : i32
    %c0_i32_0 = arith.constant 0 : i32
    %c0_i32_1 = arith.constant 0 : i32
    return %c0_i32, %c0_i32_0 : i32, i32
  }
  func.func @transform_7(%arg0: i32) -> (i32, i32) {
    %c0_i32 = arith.constant 0 : i32
    %c0_i32_0 = arith.constant 0 : i32
    %c0_i32_1 = arith.constant 0 : i32
    return %c0_i32, %c0_i32_0 : i32, i32
  }
  func.func @transform_8(%arg0: i32) -> (i32, i32) {
    %c0_i32 = arith.constant 0 : i32
    %c0_i32_0 = arith.constant 0 : i32
    %c0_i32_1 = arith.constant 0 : i32
    return %c0_i32, %c0_i32_0 : i32, i32
  }
  func.func @transform_9(%arg0: i32) -> (i32, i32) {
    %c0_i32 = arith.constant 0 : i32
    %c0_i32_0 = arith.constant 0 : i32
    %c0_i32_1 = arith.constant 0 : i32
    return %c0_i32, %c0_i32_0 : i32, i32
  }
  func.func @transform_10(%arg0: i32) -> (i32, i32) {
    %c0_i32 = arith.constant 0 : i32
    %c0_i32_0 = arith.constant 0 : i32
    %c0_i32_1 = arith.constant 0 : i32
    return %c0_i32, %c0_i32_0 : i32, i32
  }
  func.func @transform_11(%arg0: i32) -> (i32, i32) {
    %c0_i32 = arith.constant 0 : i32
    %c0_i32_0 = arith.constant 0 : i32
    %c0_i32_1 = arith.constant 0 : i32
    return %c0_i32, %c0_i32_0 : i32, i32
  }
  func.func @transform_12(%arg0: i32) -> (i32, i32) {
    %c0_i32 = arith.constant 0 : i32
    %c0_i32_0 = arith.constant 0 : i32
    %c0_i32_1 = arith.constant 0 : i32
    return %c0_i32, %c0_i32_0 : i32, i32
  }
  func.func @transform_13(%arg0: i32) -> (i32, i32) {
    %c0_i32 = arith.constant 0 : i32
    %c0_i32_0 = arith.constant 0 : i32
    %c0_i32_1 = arith.constant 0 : i32
    return %c0_i32, %c0_i32_0 : i32, i32
  }
  func.func @transform_14(%arg0: i32) -> (i32, i32) {
    %c0_i32 = arith.constant 0 : i32
    %c0_i32_0 = arith.constant 0 : i32
    %c0_i32_1 = arith.constant 0 : i32
    return %c0_i32, %c0_i32_0 : i32, i32
  }
  func.func @transform_15(%arg0: i32) -> (i32, i32) {
    %c0_i32 = arith.constant 0 : i32
    %c0_i32_0 = arith.constant 0 : i32
    return %arg0, %c0_i32 : i32, i32
  }
}

</mosaic_0001>

<llo_original>
// kernel: dueling_dqn_forward.1
$region0: #{dueling_dqn_forward.1}
  #allocation0 [shape = 'u32[]', space=smem, size = 0x4, offset = 0x4, fixed_abs, tag = 'smem constant byte address 0x4 - core index']
  #allocation1 [shape = 'u32[144,128]{1,0:T(1,128)}', space=vmem, size = 0x12000, scoped, tag = 'internal scratch']
  %s0 = inlined_call_operand.vmem [shape: f32[16,32], index: 0, kind: input, shape index: {}]
  %s1 = inlined_call_operand.hbm [shape: bf16[32,256], index: 1, kind: input, shape index: {}]
  %s2 = inlined_call_operand.vmem [shape: f32[1,256], index: 2, kind: input, shape index: {}]
  %s3 = inlined_call_operand.hbm [shape: bf16[256,256], index: 3, kind: input, shape index: {}]
  %s4 = inlined_call_operand.vmem [shape: f32[1,256], index: 4, kind: input, shape index: {}]
  %s5 = inlined_call_operand.hbm [shape: bf16[256,512], index: 5, kind: input, shape index: {}]
  %s6 = inlined_call_operand.vmem [shape: f32[1,512], index: 6, kind: input, shape index: {}]
  %s7 = inlined_call_operand.hbm [shape: bf16[512,512], index: 7, kind: input, shape index: {}]
  %s8 = inlined_call_operand.vmem [shape: f32[1,512], index: 8, kind: input, shape index: {}]
  %s9 = inlined_call_operand.hbm [shape: bf16[512,256], index: 9, kind: input, shape index: {}]
  %s10 = inlined_call_operand.vmem [shape: f32[1,256], index: 10, kind: input, shape index: {}]
  %s11 = inlined_call_operand.hbm [shape: bf16[256,256], index: 11, kind: input, shape index: {}]
  %s12 = inlined_call_operand.vmem [shape: f32[1,256], index: 12, kind: input, shape index: {}]
  %s13 = inlined_call_operand.hbm [shape: bf16[256,128], index: 13, kind: input, shape index: {}]
  %s14 = inlined_call_operand.vmem [shape: f32[1,128], index: 14, kind: input, shape index: {}]
  %s15 = inlined_call_operand.vmem [shape: f32[16,128], index: 15, kind: output, shape index: {}]
  %s16 = sld [smem:[#allocation0]]
  $region98: #{dueling_dqn_forward.1} parent=0
    _
  %s18 = ssub.s32 1, %s16
  %s19 = scalar_select 0, %s18, %s16
  $region1: #{dueling_dqn_forward.1} parent=0
    #allocation2 [shape = 'u8[16384]{0}', space=vmem, size = 0x4000, scoped, tag = 'input window, operand 1, single buffered']
    #allocation3 [shape = 's32[1]{0}', space=sflag, size = 0x4, scoped, tag = 'scoped memory for dueling_dqn_forward.1']
    #allocation4 [shape = 'u8[131072]{0}', space=vmem, size = 0x20000, scoped, tag = 'input window, operand 3, single buffered']
    #allocation5 [shape = 's32[1]{0}', space=sflag, size = 0x4, scoped, tag = 'scoped memory for dueling_dqn_forward.1']
    #allocation6 [shape = 'u8[262144]{0}', space=vmem, size = 0x40000, scoped, tag = 'input window, operand 5, single buffered']
    #allocation7 [shape = 'u8[524288]{0}', space=vmem, size = 0x80000, scoped, tag = 'input window, operand 7, single buffered']
    #allocation8 [shape = 's32[1]{0}', space=sflag, size = 0x4, scoped, tag = 'scoped memory for dueling_dqn_forward.1']
    #allocation9 [shape = 'u8[262144]{0}', space=vmem, size = 0x40000, scoped, tag = 'input window, operand 9, single buffered']
    #allocation10 [shape = 'u8[131072]{0}', space=vmem, size = 0x20000, scoped, tag = 'input window, operand 11, single buffered']
    #allocation11 [shape = 's32[1]{0}', space=sflag, size = 0x4, scoped, tag = 'scoped memory for dueling_dqn_forward.1']
    #allocation12 [shape = 'u8[65536]{0}', space=vmem, size = 0x10000, scoped, tag = 'input window, operand 13, single buffered']
    %20 = vsyncpa [#allocation3], 0
    %21 = vsyncpa [#allocation5], 0
    %22 = vsyncpa [#allocation8], 0
    %23 = vsyncpa [#allocation11], 0
    // Predicated region
    $region2: #{dueling_dqn_forward.1} parent=1 // pred_check
      _
    $region3: #{dueling_dqn_forward.1} parent=1 // pred_check_branch
      %25 = sbr.rel (0) target = $region5
    $region4: #{dueling_dqn_forward.1} parent=1 // pred_region
      _
    $region5: #{dueling_dqn_forward.1} parent=1 // pred_fallthru
      _
    // Predicated region
    $region6: #{dueling_dqn_forward.1} parent=1 // pred_check
      _
    $region7: #{dueling_dqn_forward.1} parent=1 // pred_check_branch
      %27 = sbr.rel (0) target = $region9
    $region8: #{dueling_dqn_forward.1} parent=1 // pred_region
      %s29 = ssub.s32 512, 512
      %30 = vsyncadd [#allocation3], %s29
      %s31 = sshll.u32 [#allocation2], 4
      %s32 = int_to_ptr.vmem [resolvable:$true] %s31
      %37 = dma.hbm_to_vmem [thread:$0]  %s1, 512, %s32, [#allocation3], 128, 128, 8
    $region9: #{dueling_dqn_forward.1} parent=1 // pred_fallthru
      _
    // Predicated region
    $region10: #{dueling_dqn_forward.1} parent=1 // pred_check
      _
    $region11: #{dueling_dqn_forward.1} parent=1 // pred_check_branch
      %39 = sbr.rel (0) target = $region13
    $region12: #{dueling_dqn_forward.1} parent=1 // pred_region
      _
    $region13: #{dueling_dqn_forward.1} parent=1 // pred_fallthru
      _
    // Predicated region
    $region14: #{dueling_dqn_forward.1} parent=1 // pred_check
      _
    $region15: #{dueling_dqn_forward.1} parent=1 // pred_check_branch
      %41 = sbr.rel (0) target = $region17
    $region16: #{dueling_dqn_forward.1} parent=1 // pred_region
      %s43 = ssub.s32 4096, 4096
      %44 = vsyncadd [#allocation5], %s43
      %s45 = sshll.u32 [#allocation4], 4
      %s46 = int_to_ptr.vmem [resolvable:$true] %s45
      %51 = dma.hbm_to_vmem [thread:$0]  %s3, 4096, %s46, [#allocation5], 128, 128, 8
    $region17: #{dueling_dqn_forward.1} parent=1 // pred_fallthru
      _
    // Predicated region
    $region18: #{dueling_dqn_forward.1} parent=1 // pred_check
      _
    $region19: #{dueling_dqn_forward.1} parent=1 // pred_check_branch
      %53 = sbr.rel (0) target = $region21
    $region20: #{dueling_dqn_forward.1} parent=1 // pred_region
      _
    $region21: #{dueling_dqn_forward.1} parent=1 // pred_fallthru
      _
    // Predicated region
    $region22: #{dueling_dqn_forward.1} parent=1 // pred_check
      _
    $region23: #{dueling_dqn_forward.1} parent=1 // pred_check_branch
      %55 = sbr.rel (0) target = $region25
    $region24: #{dueling_dqn_forward.1} parent=1 // pred_region
      %s57 = ssub.s32 8192, 8192
      %58 = vsyncadd [#allocation5], %s57
      %s59 = sshll.u32 [#allocation6], 4
      %s60 = int_to_ptr.vmem [resolvable:$true] %s59
      %65 = dma.hbm_to_vmem [thread:$0]  %s5, 8192, %s60, [#allocation5], 256, 256, 16
    $region25: #{dueling_dqn_forward.1} parent=1 // pred_fallthru
      _
    // Predicated region
    $region26: #{dueling_dqn_forward.1} parent=1 // pred_check
      _
    $region27: #{dueling_dqn_forward.1} parent=1 // pred_check_branch
      %67 = sbr.rel (0) target = $region29
    $region28: #{dueling_dqn_forward.1} parent=1 // pred_region
      _
    $region29: #{dueling_dqn_forward.1} parent=1 // pred_fallthru
      _
    // Predicated region
    $region30: #{dueling_dqn_forward.1} parent=1 // pred_check
      _
    $region31: #{dueling_dqn_forward.1} parent=1 // pred_check_branch
      %69 = sbr.rel (0) target = $region33
    $region32: #{dueling_dqn_forward.1} parent=1 // pred_region
      %s71 = ssub.s32 16384, 16384
      %72 = vsyncadd [#allocation8], %s71
      %s73 = sshll.u32 [#allocation7], 4
      %s74 = int_to_ptr.vmem [resolvable:$true] %s73
      %79 = dma.hbm_to_vmem [thread:$0]  %s7, 16384, %s74, [#allocation8], 256, 256, 16
    $region33: #{dueling_dqn_forward.1} parent=1 // pred_fallthru
      _
    // Predicated region
    $region34: #{dueling_dqn_forward.1} parent=1 // pred_check
      _
    $region35: #{dueling_dqn_forward.1} parent=1 // pred_check_branch
      %81 = sbr.rel (0) target = $region37
    $region36: #{dueling_dqn_forward.1} parent=1 // pred_region
      _
    $region37: #{dueling_dqn_forward.1} parent=1 // pred_fallthru
      _
    // Predicated region
    $region38: #{dueling_dqn_forward.1} parent=1 // pred_check
      _
    $region39: #{dueling_dqn_forward.1} parent=1 // pred_check_branch
      %83 = sbr.rel (0) target = $region41
    $region40: #{dueling_dqn_forward.1} parent=1 // pred_region
      %s85 = ssub.s32 8192, 8192
      %86 = vsyncadd [#allocation8], %s85
      %s87 = sshll.u32 [#allocation9], 4
      %s88 = int_to_ptr.vmem [resolvable:$true] %s87
      %93 = dma.hbm_to_vmem [thread:$0]  %s9, 8192, %s88, [#allocation8], 128, 128, 8
    $region41: #{dueling_dqn_forward.1} parent=1 // pred_fallthru
      _
    // Predicated region
    $region42: #{dueling_dqn_forward.1} parent=1 // pred_check
      _
    $region43: #{dueling_dqn_forward.1} parent=1 // pred_check_branch
      %95 = sbr.rel (0) target = $region45
    $region44: #{dueling_dqn_forward.1} parent=1 // pred_region
      _
    $region45: #{dueling_dqn_forward.1} parent=1 // pred_fallthru
      _
    // Predicated region
    $region46: #{dueling_dqn_forward.1} parent=1 // pred_check
      _
    $region47: #{dueling_dqn_forward.1} parent=1 // pred_check_branch
      %97 = sbr.rel (0) target = $region49
    $region48: #{dueling_dqn_forward.1} parent=1 // pred_region
      %s99 = ssub.s32 4096, 4096
      %100 = vsyncadd [#allocation11], %s99
      %s101 = sshll.u32 [#allocation10], 4
      %s102 = int_to_ptr.vmem [resolvable:$true] %s101
      %107 = dma.hbm_to_vmem [thread:$0]  %s11, 4096, %s102, [#allocation11], 128, 128, 8
    $region49: #{dueling_dqn_forward.1} parent=1 // pred_fallthru
      _
    // Predicated region
    $region50: #{dueling_dqn_forward.1} parent=1 // pred_check
      _
    $region51: #{dueling_dqn_forward.1} parent=1 // pred_check_branch
      %109 = sbr.rel (0) target = $region53
    $region52: #{dueling_dqn_forward.1} parent=1 // pred_region
      _
    $region53: #{dueling_dqn_forward.1} parent=1 // pred_fallthru
      _
    // Predicated region
    $region54: #{dueling_dqn_forward.1} parent=1 // pred_check
      _
    $region55: #{dueling_dqn_forward.1} parent=1 // pred_check_branch
      %111 = sbr.rel (0) target = $region57
    $region56: #{dueling_dqn_forward.1} parent=1 // pred_region
      %s113 = ssub.s32 2048, 2048
      %114 = vsyncadd [#allocation11], %s113
      %s115 = sshll.u32 [#allocation12], 4
      %s116 = int_to_ptr.vmem [resolvable:$true] %s115
      %121 = dma.hbm_to_vmem [thread:$0]  %s13, 2048, %s116, [#allocation11], 64, 64, 4
    $region57: #{dueling_dqn_forward.1} parent=1 // pred_fallthru
      _
    // Predicated region
    $region58: #{dueling_dqn_forward.1} parent=1 // pred_check
      _
    $region59: #{dueling_dqn_forward.1} parent=1 // pred_check_branch
      %123 = sbr.rel (0) target = $region61
    $region60: #{dueling_dqn_forward.1} parent=1 // pred_region
      _
    $region61: #{dueling_dqn_forward.1} parent=1 // pred_fallthru
      _
    // Predicated region
    $region62: #{dueling_dqn_forward.1} parent=1 // pred_check
      _
    $region63: #{dueling_dqn_forward.1} parent=1 // pred_check_branch
      %125 = sbr.rel (0) target = $region65
    $region64: #{dueling_dqn_forward.1} parent=1 // pred_region
      %126 = dma.done [#allocation3], 512
    $region65: #{dueling_dqn_forward.1} parent=1 // pred_fallthru
      _
    // Predicated region
    $region66: #{dueling_dqn_forward.1} parent=1 // pred_check
      _
    $region67: #{dueling_dqn_forward.1} parent=1 // pred_check_branch
      %128 = sbr.rel (0) target = $region69
    $region68: #{dueling_dqn_forward.1} parent=1 // pred_region
      %129 = dma.done [#allocation5], 4096
    $region69: #{dueling_dqn_forward.1} parent=1 // pred_fallthru
      _
    // Predicated region
    $region70: #{dueling_dqn_forward.1} parent=1 // pred_check
      _
    $region71: #{dueling_dqn_forward.1} parent=1 // pred_check_branch
      %131 = sbr.rel (0) target = $region73
    $region72: #{dueling_dqn_forward.1} parent=1 // pred_region
      %132 = dma.done [#allocation5], 8192
    $region73: #{dueling_dqn_forward.1} parent=1 // pred_fallthru
      _
    // Predicated region
    $region74: #{dueling_dqn_forward.1} parent=1 // pred_check
      _
    $region75: #{dueling_dqn_forward.1} parent=1 // pred_check_branch
      %134 = sbr.rel (0) target = $region77
    $region76: #{dueling_dqn_forward.1} parent=1 // pred_region
      %135 = dma.done [#allocation8], 16384
    $region77: #{dueling_dqn_forward.1} parent=1 // pred_fallthru
      _
    // Predicated region
    $region78: #{dueling_dqn_forward.1} parent=1 // pred_check
      _
    $region79: #{dueling_dqn_forward.1} parent=1 // pred_check_branch
      %137 = sbr.rel (0) target = $region81
    $region80: #{dueling_dqn_forward.1} parent=1 // pred_region
      %138 = dma.done [#allocation8], 8192
    $region81: #{dueling_dqn_forward.1} parent=1 // pred_fallthru
      _
    // Predicated region
    $region82: #{dueling_dqn_forward.1} parent=1 // pred_check
      _
    $region83: #{dueling_dqn_forward.1} parent=1 // pred_check_branch
      %140 = sbr.rel (0) target = $region85
    $region84: #{dueling_dqn_forward.1} parent=1 // pred_region
      %141 = dma.done [#allocation11], 4096
    $region85: #{dueling_dqn_forward.1} parent=1 // pred_fallthru
      _
    // Predicated region
    $region86: #{dueling_dqn_forward.1} parent=1 // pred_check
      _
    $region87: #{dueling_dqn_forward.1} parent=1 // pred_check_branch
      %143 = sbr.rel (0) target = $region89
    $region88: #{dueling_dqn_forward.1} parent=1 // pred_region
      %144 = dma.done [#allocation11], 2048
    $region89: #{dueling_dqn_forward.1} parent=1 // pred_fallthru
      _
    %v146 = vld [vmem:[%s0] sm:$0xff]
    %v147 = vld [vmem:[%s0 + $0x8] sm:$0xff]
    %v148 = vpack.c.bf16 %v147, %v146
    %v149 = vld [vmem:[#allocation2] sm:$0xff]
    %v150 = vld [vmem:[#allocation2 + $0x8] sm:$0xff]
    %v151 = vld [vmem:[#allocation2 + $0x10] sm:$0xff]
    %v152 = vld [vmem:[#allocation2 + $0x18] sm:$0xff]
    %v153 = vld [vmem:[%s2] sm:$0x3]
    %v155 = vlaneseq
    %v156 = vshrl.u32 %v155, 7
    %v157 = vsub.s32 0, %v156
    %v158 = vrot.slane %v153, %v157
    %v159 = vlaneseq
    %v160 = vshrl.u32 %v159, 7
    %v161 = vsub.s32 1, %v160
    %v162 = vrot.slane %v153, %v161
    %v169 = vunpack.c.l.b16 %v149
    %v170 = vunpack.c.h.b16 %v149
    %v171 = vunpack.c.l.b16 %v150
    %v172 = vunpack.c.h.b16 %v150
    %v173 = vunpack.c.l.b16 %v151
    %v174 = vunpack.c.h.b16 %v151
    %v175 = vunpack.c.l.b16 %v152
    %v176 = vunpack.c.h.b16 %v152
    %v177 = vpack.c.b16 %v171, %v169
    %v178 = vpack.c.b16 %v172, %v170
    %v179 = vpack.c.b16 %v175, %v173
    %v180 = vpack.c.b16 %v176, %v174
    %vm185 = vcmask 261120
    %v187 = vsel %vm185, %v148, 0
    %189 = vmatprep.subr.bf16.mxu0 %v178
    %190 = vmatpush1.bf16.msra.mxu0 %v177
    %191 = vmatprep.subr.bf16.mxu0 %v180
    %192 = vmatpush1.bf16.msra.mxu0 %v179
    %193 = vmatprep.subr.bf16.mxu0 0
    %194 = vmatpush1.bf16.msra.mxu0 0
    %195 = vmatprep.subr.bf16.mxu0 0
    %196 = vmatpush1.bf16.msra.mxu0 0
    %197 = vmatprep.subr.bf16.mxu0 0
    %198 = vmatpush1.bf16.msra.mxu0 0
    %199 = vmatprep.subr.bf16.mxu0 0
    %200 = vmatpush1.bf16.msra.mxu0 0
    %201 = vmatprep.subr.bf16.mxu0 0
    %202 = vmatpush1.bf16.msra.mxu0 0
    %203 = vmatprep.subr.bf16.mxu0 0
    %204 = vmatpush1.bf16.msra.mxu0 0
    %205 = vmatprep.subr.bf16.mxu0 0
    %206 = vmatpush1.bf16.msra.mxu0 0
    %207 = vmatprep.subr.bf16.mxu0 0
    %208 = vmatpush1.bf16.msra.mxu0 0
    %209 = vmatprep.subr.bf16.mxu0 0
    %210 = vmatpush1.bf16.msra.mxu0 0
    %211 = vmatprep.subr.bf16.mxu0 0
    %212 = vmatpush1.bf16.msra.mxu0 0
    %213 = vmatprep.subr.bf16.mxu0 0
    %214 = vmatpush1.bf16.msra.mxu0 0
    %215 = vmatprep.subr.bf16.mxu0 0
    %216 = vmatpush1.bf16.msra.mxu0 0
    %217 = vmatprep.subr.bf16.mxu0 0
    %218 = vmatpush1.bf16.msra.mxu0 0
    %219 = vmatprep.subr.bf16.mxu0 0
    %220 = vmatpush1.bf16.msra.mxu0 0
    %221 = vmatprep.mubr.bf16.mxu0 0
    %222 = vmatmul.mubr.bf16.gmra.mrb[0].mxu0 %v187
    %v223 = vpop.f32.mrb[0].mxu0
    %v224 = vadd.f32 %v158, %v223
    %v225 = vpop.f32.mrb[0].mxu0
    %v226 = vadd.f32 %v162, %v225
    %v227 = vpop.f32.mrb[0].mxu0
    %v228 = vadd.f32 %v158, %v227
    %v229 = vpop.f32.mrb[0].mxu0
    %v230 = vadd.f32 %v162, %v229
    %231 = vdwg.mxu0
    %v232 = vmax.f32 %v224, 0.0
    %v233 = vmax.f32 %v226, 0.0
    %v234 = vmax.f32 %v228, 0.0
    %v235 = vmax.f32 %v230, 0.0
    %v236 = vpack.c.bf16 %v234, %v232
    %v237 = vpack.c.bf16 %v235, %v233
    %v238 = vld [vmem:[#allocation4] sm:$0xff]
    %v239 = vld [vmem:[#allocation4 + $0x8] sm:$0xff]
    %v240 = vld [vmem:[#allocation4 + $0x10] sm:$0xff]
    %v241 = vld [vmem:[#allocation4 + $0x18] sm:$0xff]
    %v242 = vld [vmem:[#allocation4 + $0x20] sm:$0xff]
    %v243 = vld [vmem:[#allocation4 + $0x28] sm:$0xff]
    %v244 = vld [vmem:[#allocation4 + $0x30] sm:$0xff]
    %v245 = vld [vmem:[#allocation4 + $0x38] sm:$0xff]
    %v246 = vld [vmem:[#allocation4 + $0x40] sm:$0xff]
    %v247 = vld [vmem:[#allocation4 + $0x48] sm:$0xff]
    %v248 = vld [vmem:[#allocation4 + $0x50] sm:$0xff]
    %v249 = vld [vmem:[#allocation4 + $0x58] sm:$0xff]
    %v250 = vld [vmem:[#allocation4 + $0x60] sm:$0xff]
    %v251 = vld [vmem:[#allocation4 + $0x68] sm:$0xff]
    %v252 = vld [vmem:[#allocation4 + $0x70] sm:$0xff]
    %v253 = vld [vmem:[#allocation4 + $0x78] sm:$0xff]
    %v254 = vld [vmem:[#allocation4 + $0x80] sm:$0xff]
    %v255 = vld [vmem:[#allocation4 + $0x88] sm:$0xff]
    %v256 = vld [vmem:[#allocation4 + $0x90] sm:$0xff]
    %v257 = vld [vmem:[#allocation4 + $0x98] sm:$0xff]
    %v258 = vld [vmem:[#allocation4 + $0xa0] sm:$0xff]
    %v259 = vld [vmem:[#allocation4 + $0xa8] sm:$0xff]
    %v260 = vld [vmem:[#allocation4 + $0xb0] sm:$0xff]
    %v261 = vld [vmem:[#allocation4 + $0xb8] sm:$0xff]
    %v262 = vld [vmem:[#allocation4 + $0xc0] sm:$0xff]
    %v263 = vld [vmem:[#allocation4 + $0xc8] sm:$0xff]
    %v264 = vld [vmem:[#allocation4 + $0xd0] sm:$0xff]
    %v265 = vld [vmem:[#allocation4 + $0xd8] sm:$0xff]
    %v266 = vld [vmem:[#allocation4 + $0xe0] sm:$0xff]
    %v267 = vld [vmem:[#allocation4 + $0xe8] sm:$0xff]
    %v268 = vld [vmem:[#allocation4 + $0xf0] sm:$0xff]
    %v269 = vld [vmem:[#allocation4 + $0xf8] sm:$0xff]
    %v270 = vld [vmem:[%s4] sm:$0x3]
    %v272 = vlaneseq
    %v273 = vshrl.u32 %v272, 7
    %v274 = vsub.s32 0, %v273
    %v275 = vrot.slane %v270, %v274
    %v276 = vlaneseq
    %v277 = vshrl.u32 %v276, 7
    %v278 = vsub.s32 1, %v277
    %v279 = vrot.slane %v270, %v278
    %v314 = vunpack.c.l.b16 %v238
    %v315 = vunpack.c.h.b16 %v238
    %v316 = vunpack.c.l.b16 %v239
    %v317 = vunpack.c.h.b16 %v239
    %v318 = vunpack.c.l.b16 %v240
    %v319 = vunpack.c.h.b16 %v240
    %v320 = vunpack.c.l.b16 %v241
    %v321 = vunpack.c.h.b16 %v241
    %v322 = vunpack.c.l.b16 %v242
    %v323 = vunpack.c.h.b16 %v242
    %v324 = vunpack.c.l.b16 %v243
    %v325 = vunpack.c.h.b16 %v243
    %v326 = vunpack.c.l.b16 %v244
    %v327 = vunpack.c.h.b16 %v244
    %v328 = vunpack.c.l.b16 %v245
    %v329 = vunpack.c.h.b16 %v245
    %v330 = vunpack.c.l.b16 %v246
    %v331 = vunpack.c.h.b16 %v246
    %v332 = vunpack.c.l.b16 %v247
    %v333 = vunpack.c.h.b16 %v247
    %v334 = vunpack.c.l.b16 %v248
    %v335 = vunpack.c.h.b16 %v248
    %v336 = vunpack.c.l.b16 %v249
    %v337 = vunpack.c.h.b16 %v249
    %v338 = vunpack.c.l.b16 %v250
    %v339 = vunpack.c.h.b16 %v250
    %v340 = vunpack.c.l.b16 %v251
    %v341 = vunpack.c.h.b16 %v251
    %v342 = vunpack.c.l.b16 %v252
    %v343 = vunpack.c.h.b16 %v252
    %v344 = vunpack.c.l.b16 %v253
    %v345 = vunpack.c.h.b16 %v253
    %v346 = vunpack.c.l.b16 %v254
    %v347 = vunpack.c.h.b16 %v254
    %v348 = vunpack.c.l.b16 %v255
    %v349 = vunpack.c.h.b16 %v255
    %v350 = vunpack.c.l.b16 %v256
    %v351 = vunpack.c.h.b16 %v256
    %v352 = vunpack.c.l.b16 %v257
    %v353 = vunpack.c.h.b16 %v257
    %v354 = vunpack.c.l.b16 %v258
    %v355 = vunpack.c.h.b16 %v258
    %v356 = vunpack.c.l.b16 %v259
    %v357 = vunpack.c.h.b16 %v259
    %v358 = vunpack.c.l.b16 %v260
    %v359 = vunpack.c.h.b16 %v260
    %v360 = vunpack.c.l.b16 %v261
    %v361 = vunpack.c.h.b16 %v261
    %v362 = vunpack.c.l.b16 %v262
    %v363 = vunpack.c.h.b16 %v262
    %v364 = vunpack.c.l.b16 %v263
    %v365 = vunpack.c.h.b16 %v263
    %v366 = vunpack.c.l.b16 %v264
    %v367 = vunpack.c.h.b16 %v264
    %v368 = vunpack.c.l.b16 %v265
    %v369 = vunpack.c.h.b16 %v265
    %v370 = vunpack.c.l.b16 %v266
    %v371 = vunpack.c.h.b16 %v266
    %v372 = vunpack.c.l.b16 %v267
    %v373 = vunpack.c.h.b16 %v267
    %v374 = vunpack.c.l.b16 %v268
    %v375 = vunpack.c.h.b16 %v268
    %v376 = vunpack.c.l.b16 %v269
    %v377 = vunpack.c.h.b16 %v269
    %v378 = vpack.c.b16 %v316, %v314
    %v379 = vpack.c.b16 %v317, %v315
    %v380 = vpack.c.b16 %v320, %v318
    %v381 = vpack.c.b16 %v321, %v319
    %v382 = vpack.c.b16 %v324, %v322
    %v383 = vpack.c.b16 %v325, %v323
    %v384 = vpack.c.b16 %v328, %v326
    %v385 = vpack.c.b16 %v329, %v327
    %v386 = vpack.c.b16 %v332, %v330
    %v387 = vpack.c.b16 %v333, %v331
    %v388 = vpack.c.b16 %v336, %v334
    %v389 = vpack.c.b16 %v337, %v335
    %v390 = vpack.c.b16 %v340, %v338
    %v391 = vpack.c.b16 %v341, %v339
    %v392 = vpack.c.b16 %v344, %v342
    %v393 = vpack.c.b16 %v345, %v343
    %v394 = vpack.c.b16 %v348, %v346
    %v395 = vpack.c.b16 %v349, %v347
    %v396 = vpack.c.b16 %v352, %v350
    %v397 = vpack.c.b16 %v353, %v351
    %v398 = vpack.c.b16 %v356, %v354
    %v399 = vpack.c.b16 %v357, %v355
    %v400 = vpack.c.b16 %v360, %v358
    %v401 = vpack.c.b16 %v361, %v359
    %v402 = vpack.c.b16 %v364, %v362
    %v403 = vpack.c.b16 %v365, %v363
    %v404 = vpack.c.b16 %v368, %v366
    %v405 = vpack.c.b16 %v369, %v367
    %v406 = vpack.c.b16 %v372, %v370
    %v407 = vpack.c.b16 %v373, %v371
    %v408 = vpack.c.b16 %v376, %v374
    %v409 = vpack.c.b16 %v377, %v375
    %442 = vmatprep.subr.bf16.mxu0 %v379
    %443 = vmatpush1.bf16.msra.mxu0 %v378
    %444 = vmatprep.subr.bf16.mxu0 %v381
    %445 = vmatpush1.bf16.msra.mxu0 %v380
    %446 = vmatprep.subr.bf16.mxu0 %v383
    %447 = vmatpush1.bf16.msra.mxu0 %v382
    %448 = vmatprep.subr.bf16.mxu0 %v385
    %449 = vmatpush1.bf16.msra.mxu0 %v384
    %450 = vmatprep.subr.bf16.mxu0 %v387
    %451 = vmatpush1.bf16.msra.mxu0 %v386
    %452 = vmatprep.subr.bf16.mxu0 %v389
    %453 = vmatpush1.bf16.msra.mxu0 %v388
    %454 = vmatprep.subr.bf16.mxu0 %v391
    %455 = vmatpush1.bf16.msra.mxu0 %v390
    %456 = vmatprep.subr.bf16.mxu0 %v393
    %457 = vmatpush1.bf16.msra.mxu0 %v392
    %458 = vmatprep.subr.bf16.mxu0 %v395
    %459 = vmatpush1.bf16.msra.mxu0 %v394
    %460 = vmatprep.subr.bf16.mxu0 %v397
    %461 = vmatpush1.bf16.msra.mxu0 %v396
    %462 = vmatprep.subr.bf16.mxu0 %v399
    %463 = vmatpush1.bf16.msra.mxu0 %v398
    %464 = vmatprep.subr.bf16.mxu0 %v401
    %465 = vmatpush1.bf16.msra.mxu0 %v400
    %466 = vmatprep.subr.bf16.mxu0 %v403
    %467 = vmatpush1.bf16.msra.mxu0 %v402
    %468 = vmatprep.subr.bf16.mxu0 %v405
    %469 = vmatpush1.bf16.msra.mxu0 %v404
    %470 = vmatprep.subr.bf16.mxu0 %v407
    %471 = vmatpush1.bf16.msra.mxu0 %v406
    %472 = vmatprep.subr.bf16.mxu0 %v409
    %473 = vmatpush1.bf16.msra.mxu0 %v408
    %474 = vmatprep.mubr.bf16.mxu0 %v237
    %475 = vmatmul.mubr.bf16.gmra.mrb[0].mxu0 %v236
    %v476 = vpop.f32.mrb[0].mxu0
    %v477 = vadd.f32 %v275, %v476
    %v478 = vpop.f32.mrb[0].mxu0
    %v479 = vadd.f32 %v279, %v478
    %v480 = vpop.f32.mrb[0].mxu0
    %v481 = vadd.f32 %v275, %v480
    %v482 = vpop.f32.mrb[0].mxu0
    %v483 = vadd.f32 %v279, %v482
    %484 = vdwg.mxu0
    %v485 = vmax.f32 %v477, 0.0
    %v486 = vmax.f32 %v479, 0.0
    %v487 = vmax.f32 %v481, 0.0
    %v488 = vmax.f32 %v483, 0.0
    %v489 = vpack.c.bf16 %v487, %v485
    %v490 = vpack.c.bf16 %v488, %v486
    %v491 = vld [vmem:[#allocation6] sm:$0xff]
    %v492 = vld [vmem:[#allocation6 + $0x8] sm:$0xff]
    %v493 = vld [vmem:[#allocation6 + $0x10] sm:$0xff]
    %v494 = vld [vmem:[#allocation6 + $0x18] sm:$0xff]
    %v495 = vld [vmem:[#allocation6 + $0x20] sm:$0xff]
    %v496 = vld [vmem:[#allocation6 + $0x28] sm:$0xff]
    %v497 = vld [vmem:[#allocation6 + $0x30] sm:$0xff]
    %v498 = vld [vmem:[#allocation6 + $0x38] sm:$0xff]
    %v499 = vld [vmem:[#allocation6 + $0x40] sm:$0xff]
    %v500 = vld [vmem:[#allocation6 + $0x48] sm:$0xff]
    %v501 = vld [vmem:[#allocation6 + $0x50] sm:$0xff]
    %v502 = vld [vmem:[#allocation6 + $0x58] sm:$0xff]
    %v503 = vld [vmem:[#allocation6 + $0x60] sm:$0xff]
    %v504 = vld [vmem:[#allocation6 + $0x68] sm:$0xff]
    %v505 = vld [vmem:[#allocation6 + $0x70] sm:$0xff]
    %v506 = vld [vmem:[#allocation6 + $0x78] sm:$0xff]
    %v507 = vld [vmem:[#allocation6 + $0x80] sm:$0xff]
    %v508 = vld [vmem:[#allocation6 + $0x88] sm:$0xff]
    %v509 = vld [vmem:[#allocation6 + $0x90] sm:$0xff]
    %v510 = vld [vmem:[#allocation6 + $0x98] sm:$0xff]
    %v511 = vld [vmem:[#allocation6 + $0xa0] sm:$0xff]
    %v512 = vld [vmem:[#allocation6 + $0xa8] sm:$0xff]
    %v513 = vld [vmem:[#allocation6 + $0xb0] sm:$0xff]
    %v514 = vld [vmem:[#allocation6 + $0xb8] sm:$0xff]
    %v515 = vld [vmem:[#allocation6 + $0xc0] sm:$0xff]
    %v516 = vld [vmem:[#allocation6 + $0xc8] sm:$0xff]
    %v517 = vld [vmem:[#allocation6 + $0xd0] sm:$0xff]
    %v518 = vld [vmem:[#allocation6 + $0xd8] sm:$0xff]
    %v519 = vld [vmem:[#allocation6 + $0xe0] sm:$0xff]
    %v520 = vld [vmem:[#allocation6 + $0xe8] sm:$0xff]
    %v521 = vld [vmem:[#allocation6 + $0xf0] sm:$0xff]
    %v522 = vld [vmem:[#allocation6 + $0xf8] sm:$0xff]
    %v523 = vld [vmem:[#allocation6 + $0x100] sm:$0xff]
    %v524 = vld [vmem:[#allocation6 + $0x108] sm:$0xff]
    %v525 = vld [vmem:[#allocation6 + $0x110] sm:$0xff]
    %v526 = vld [vmem:[#allocation6 + $0x118] sm:$0xff]
    %v527 = vld [vmem:[#allocation6 + $0x120] sm:$0xff]
    %v528 = vld [vmem:[#allocation6 + $0x128] sm:$0xff]
    %v529 = vld [vmem:[#allocation6 + $0x130] sm:$0xff]
    %v530 = vld [vmem:[#allocation6 + $0x138] sm:$0xff]
    %v531 = vld [vmem:[#allocation6 + $0x140] sm:$0xff]
    %v532 = vld [vmem:[#allocation6 + $0x148] sm:$0xff]
    %v533 = vld [vmem:[#allocation6 + $0x150] sm:$0xff]
    %v534 = vld [vmem:[#allocation6 + $0x158] sm:$0xff]
    %v535 = vld [vmem:[#allocation6 + $0x160] sm:$0xff]
    %v536 = vld [vmem:[#allocation6 + $0x168] sm:$0xff]
    %v537 = vld [vmem:[#allocation6 + $0x170] sm:$0xff]
    %v538 = vld [vmem:[#allocation6 + $0x178] sm:$0xff]
    %v539 = vld [vmem:[#allocation6 + $0x180] sm:$0xff]
    %v540 = vld [vmem:[#allocation6 + $0x188] sm:$0xff]
    %v541 = vld [vmem:[#allocation6 + $0x190] sm:$0xff]
    %v542 = vld [vmem:[#allocation6 + $0x198] sm:$0xff]
    %v543 = vld [vmem:[#allocation6 + $0x1a0] sm:$0xff]
    %v544 = vld [vmem:[#allocation6 + $0x1a8] sm:$0xff]
    %v545 = vld [vmem:[#allocation6 + $0x1b0] sm:$0xff]
    %v546 = vld [vmem:[#allocation6 + $0x1b8] sm:$0xff]
    %v547 = vld [vmem:[#allocation6 + $0x1c0] sm:$0xff]
    %v548 = vld [vmem:[#allocation6 + $0x1c8] sm:$0xff]
    %v549 = vld [vmem:[#allocation6 + $0x1d0] sm:$0xff]
    %v550 = vld [vmem:[#allocation6 + $0x1d8] sm:$0xff]
    %v551 = vld [vmem:[#allocation6 + $0x1e0] sm:$0xff]
    %v552 = vld [vmem:[#allocation6 + $0x1e8] sm:$0xff]
    %v553 = vld [vmem:[#allocation6 + $0x1f0] sm:$0xff]
    %v554 = vld [vmem:[#allocation6 + $0x1f8] sm:$0xff]
    %v555 = vld [vmem:[%s6] sm:$0xf]
    %v557 = vlaneseq
    %v558 = vshrl.u32 %v557, 7
    %v559 = vsub.s32 0, %v558
    %v560 = vrot.slane %v555, %v559
    %v561 = vlaneseq
    %v562 = vshrl.u32 %v561, 7
    %v563 = vsub.s32 1, %v562
    %v564 = vrot.slane %v555, %v563
    %v565 = vlaneseq
    %v566 = vshrl.u32 %v565, 7
    %v567 = vsub.s32 2, %v566
    %v568 = vrot.slane %v555, %v567
    %v569 = vlaneseq
    %v570 = vshrl.u32 %v569, 7
    %v571 = vsub.s32 3, %v570
    %v572 = vrot.slane %v555, %v571
    %v641 = vunpack.c.l.b16 %v491
    %v642 = vunpack.c.h.b16 %v491
    %v643 = vunpack.c.l.b16 %v492
    %v644 = vunpack.c.h.b16 %v492
    %v645 = vunpack.c.l.b16 %v493
    %v646 = vunpack.c.h.b16 %v493
    %v647 = vunpack.c.l.b16 %v494
    %v648 = vunpack.c.h.b16 %v494
    %v649 = vunpack.c.l.b16 %v495
    %v650 = vunpack.c.h.b16 %v495
    %v651 = vunpack.c.l.b16 %v496
    %v652 = vunpack.c.h.b16 %v496
    %v653 = vunpack.c.l.b16 %v497
    %v654 = vunpack.c.h.b16 %v497
    %v655 = vunpack.c.l.b16 %v498
    %v656 = vunpack.c.h.b16 %v498
    %v657 = vunpack.c.l.b16 %v499
    %v658 = vunpack.c.h.b16 %v499
    %v659 = vunpack.c.l.b16 %v500
    %v660 = vunpack.c.h.b16 %v500
    %v661 = vunpack.c.l.b16 %v501
    %v662 = vunpack.c.h.b16 %v501
    %v663 = vunpack.c.l.b16 %v502
    %v664 = vunpack.c.h.b16 %v502
    %v665 = vunpack.c.l.b16 %v503
    %v666 = vunpack.c.h.b16 %v503
    %v667 = vunpack.c.l.b16 %v504
    %v668 = vunpack.c.h.b16 %v504
    %v669 = vunpack.c.l.b16 %v505
    %v670 = vunpack.c.h.b16 %v505
    %v671 = vunpack.c.l.b16 %v506
    %v672 = vunpack.c.h.b16 %v506
    %v673 = vunpack.c.l.b16 %v507
    %v674 = vunpack.c.h.b16 %v507
    %v675 = vunpack.c.l.b16 %v508
    %v676 = vunpack.c.h.b16 %v508
    %v677 = vunpack.c.l.b16 %v509
    %v678 = vunpack.c.h.b16 %v509
    %v679 = vunpack.c.l.b16 %v510
    %v680 = vunpack.c.h.b16 %v510
    %v681 = vunpack.c.l.b16 %v511
    %v682 = vunpack.c.h.b16 %v511
    %v683 = vunpack.c.l.b16 %v512
    %v684 = vunpack.c.h.b16 %v512
    %v685 = vunpack.c.l.b16 %v513
    %v686 = vunpack.c.h.b16 %v513
    %v687 = vunpack.c.l.b16 %v514
    %v688 = vunpack.c.h.b16 %v514
    %v689 = vunpack.c.l.b16 %v515
    %v690 = vunpack.c.h.b16 %v515
    %v691 = vunpack.c.l.b16 %v516
    %v692 = vunpack.c.h.b16 %v516
    %v693 = vunpack.c.l.b16 %v517
    %v694 = vunpack.c.h.b16 %v517
    %v695 = vunpack.c.l.b16 %v518
    %v696 = vunpack.c.h.b16 %v518
    %v697 = vunpack.c.l.b16 %v519
    %v698 = vunpack.c.h.b16 %v519
    %v699 = vunpack.c.l.b16 %v520
    %v700 = vunpack.c.h.b16 %v520
    %v701 = vunpack.c.l.b16 %v521
    %v702 = vunpack.c.h.b16 %v521
    %v703 = vunpack.c.l.b16 %v522
    %v704 = vunpack.c.h.b16 %v522
    %v705 = vunpack.c.l.b16 %v523
    %v706 = vunpack.c.h.b16 %v523
    %v707 = vunpack.c.l.b16 %v524
    %v708 = vunpack.c.h.b16 %v524
    %v709 = vunpack.c.l.b16 %v525
    %v710 = vunpack.c.h.b16 %v525
    %v711 = vunpack.c.l.b16 %v526
    %v712 = vunpack.c.h.b16 %v526
    %v713 = vunpack.c.l.b16 %v527
    %v714 = vunpack.c.h.b16 %v527
    %v715 = vunpack.c.l.b16 %v528
    %v716 = vunpack.c.h.b16 %v528
    %v717 = vunpack.c.l.b16 %v529
    %v718 = vunpack.c.h.b16 %v529
    %v719 = vunpack.c.l.b16 %v530
    %v720 = vunpack.c.h.b16 %v530
    %v721 = vunpack.c.l.b16 %v531
    %v722 = vunpack.c.h.b16 %v531
    %v723 = vunpack.c.l.b16 %v532
    %v724 = vunpack.c.h.b16 %v532
    %v725 = vunpack.c.l.b16 %v533
    %v726 = vunpack.c.h.b16 %v533
    %v727 = vunpack.c.l.b16 %v534
    %v728 = vunpack.c.h.b16 %v534
    %v729 = vunpack.c.l.b16 %v535
    %v730 = vunpack.c.h.b16 %v535
    %v731 = vunpack.c.l.b16 %v536
    %v732 = vunpack.c.h.b16 %v536
    %v733 = vunpack.c.l.b16 %v537
    %v734 = vunpack.c.h.b16 %v537
    %v735 = vunpack.c.l.b16 %v538
    %v736 = vunpack.c.h.b16 %v538
    %v737 = vunpack.c.l.b16 %v539
    %v738 = vunpack.c.h.b16 %v539
    %v739 = vunpack.c.l.b16 %v540
    %v740 = vunpack.c.h.b16 %v540
    %v741 = vunpack.c.l.b16 %v541
    %v742 = vunpack.c.h.b16 %v541
    %v743 = vunpack.c.l.b16 %v542
    %v744 = vunpack.c.h.b16 %v542
    %v745 = vunpack.c.l.b16 %v543
    %v746 = vunpack.c.h.b16 %v543
    %v747 = vunpack.c.l.b16 %v544
    %v748 = vunpack.c.h.b16 %v544
    %v749 = vunpack.c.l.b16 %v545
    %v750 = vunpack.c.h.b16 %v545
    %v751 = vunpack.c.l.b16 %v546
    %v752 = vunpack.c.h.b16 %v546
    %v753 = vunpack.c.l.b16 %v547
    %v754 = vunpack.c.h.b16 %v547
    %v755 = vunpack.c.l.b16 %v548
    %v756 = vunpack.c.h.b16 %v548
    %v757 = vunpack.c.l.b16 %v549
    %v758 = vunpack.c.h.b16 %v549
    %v759 = vunpack.c.l.b16 %v550
    %v760 = vunpack.c.h.b16 %v550
    %v761 = vunpack.c.l.b16 %v551
    %v762 = vunpack.c.h.b16 %v551
    %v763 = vunpack.c.l.b16 %v552
    %v764 = vunpack.c.h.b16 %v552
    %v765 = vunpack.c.l.b16 %v553
    %v766 = vunpack.c.h.b16 %v553
    %v767 = vunpack.c.l.b16 %v554
    %v768 = vunpack.c.h.b16 %v554
    %v769 = vpack.c.b16 %v645, %v641
    %v770 = vpack.c.b16 %v646, %v642
    %v771 = vpack.c.b16 %v647, %v643
    %v772 = vpack.c.b16 %v648, %v644
    %v773 = vpack.c.b16 %v653, %v649
    %v774 = vpack.c.b16 %v654, %v650
    %v775 = vpack.c.b16 %v655, %v651
    %v776 = vpack.c.b16 %v656, %v652
    %v777 = vpack.c.b16 %v661, %v657
    %v778 = vpack.c.b16 %v662, %v658
    %v779 = vpack.c.b16 %v663, %v659
    %v780 = vpack.c.b16 %v664, %v660
    %v781 = vpack.c.b16 %v669, %v665
    %v782 = vpack.c.b16 %v670, %v666
    %v783 = vpack.c.b16 %v671, %v667
    %v784 = vpack.c.b16 %v672, %v668
    %v785 = vpack.c.b16 %v677, %v673
    %v786 = vpack.c.b16 %v678, %v674
    %v787 = vpack.c.b16 %v679, %v675
    %v788 = vpack.c.b16 %v680, %v676
    %v789 = vpack.c.b16 %v685, %v681
    %v790 = vpack.c.b16 %v686, %v682
    %v791 = vpack.c.b16 %v687, %v683
    %v792 = vpack.c.b16 %v688, %v684
    %v793 = vpack.c.b16 %v693, %v689
    %v794 = vpack.c.b16 %v694, %v690
    %v795 = vpack.c.b16 %v695, %v691
    %v796 = vpack.c.b16 %v696, %v692
    %v797 = vpack.c.b16 %v701, %v697
    %v798 = vpack.c.b16 %v702, %v698
    %v799 = vpack.c.b16 %v703, %v699
    %v800 = vpack.c.b16 %v704, %v700
    %v801 = vpack.c.b16 %v709, %v705
    %v802 = vpack.c.b16 %v710, %v706
    %v803 = vpack.c.b16 %v711, %v707
    %v804 = vpack.c.b16 %v712, %v708
    %v805 = vpack.c.b16 %v717, %v713
    %v806 = vpack.c.b16 %v718, %v714
    %v807 = vpack.c.b16 %v719, %v715
    %v808 = vpack.c.b16 %v720, %v716
    %v809 = vpack.c.b16 %v725, %v721
    %v810 = vpack.c.b16 %v726, %v722
    %v811 = vpack.c.b16 %v727, %v723
    %v812 = vpack.c.b16 %v728, %v724
    %v813 = vpack.c.b16 %v733, %v729
    %v814 = vpack.c.b16 %v734, %v730
    %v815 = vpack.c.b16 %v735, %v731
    %v816 = vpack.c.b16 %v736, %v732
    %v817 = vpack.c.b16 %v741, %v737
    %v818 = vpack.c.b16 %v742, %v738
    %v819 = vpack.c.b16 %v743, %v739
    %v820 = vpack.c.b16 %v744, %v740
    %v821 = vpack.c.b16 %v749, %v745
    %v822 = vpack.c.b16 %v750, %v746
    %v823 = vpack.c.b16 %v751, %v747
    %v824 = vpack.c.b16 %v752, %v748
    %v825 = vpack.c.b16 %v757, %v753
    %v826 = vpack.c.b16 %v758, %v754
    %v827 = vpack.c.b16 %v759, %v755
    %v828 = vpack.c.b16 %v760, %v756
    %v829 = vpack.c.b16 %v765, %v761
    %v830 = vpack.c.b16 %v766, %v762
    %v831 = vpack.c.b16 %v767, %v763
    %v832 = vpack.c.b16 %v768, %v764
    %897 = vmatprep.subr.bf16.mxu0 %v770
    %898 = vmatpush1.bf16.msra.mxu0 %v769
    %899 = vmatprep.subr.bf16.mxu0 %v774
    %900 = vmatpush1.bf16.msra.mxu0 %v773
    %901 = vmatprep.subr.bf16.mxu0 %v778
    %902 = vmatpush1.bf16.msra.mxu0 %v777
    %903 = vmatprep.subr.bf16.mxu0 %v782
    %904 = vmatpush1.bf16.msra.mxu0 %v781
    %905 = vmatprep.subr.bf16.mxu0 %v786
    %906 = vmatpush1.bf16.msra.mxu0 %v785
    %907 = vmatprep.subr.bf16.mxu0 %v790
    %908 = vmatpush1.bf16.msra.mxu0 %v789
    %909 = vmatprep.subr.bf16.mxu0 %v794
    %910 = vmatpush1.bf16.msra.mxu0 %v793
    %911 = vmatprep.subr.bf16.mxu0 %v798
    %912 = vmatpush1.bf16.msra.mxu0 %v797
    %913 = vmatprep.subr.bf16.mxu0 %v802
    %914 = vmatpush1.bf16.msra.mxu0 %v801
    %915 = vmatprep.subr.bf16.mxu0 %v806
    %916 = vmatpush1.bf16.msra.mxu0 %v805
    %917 = vmatprep.subr.bf16.mxu0 %v810
    %918 = vmatpush1.bf16.msra.mxu0 %v809
    %919 = vmatprep.subr.bf16.mxu0 %v814
    %920 = vmatpush1.bf16.msra.mxu0 %v813
    %921 = vmatprep.subr.bf16.mxu0 %v818
    %922 = vmatpush1.bf16.msra.mxu0 %v817
    %923 = vmatprep.subr.bf16.mxu0 %v822
    %924 = vmatpush1.bf16.msra.mxu0 %v821
    %925 = vmatprep.subr.bf16.mxu0 %v826
    %926 = vmatpush1.bf16.msra.mxu0 %v825
    %927 = vmatprep.subr.bf16.mxu0 %v830
    %928 = vmatpush1.bf16.msra.mxu0 %v829
    %929 = vmatprep.mubr.bf16.mxu0 %v490
    %930 = vmatmul.mubr.bf16.gmra.mrb[0].mxu0 %v489
    %v931 = vpop.f32.mrb[0].mxu0
    %v932 = vadd.f32 %v560, %v931
    %v933 = vpop.f32.mrb[0].mxu0
    %v934 = vadd.f32 %v564, %v933
    %v935 = vpop.f32.mrb[0].mxu0
    %v936 = vadd.f32 %v560, %v935
    %v937 = vpop.f32.mrb[0].mxu0
    %v938 = vadd.f32 %v564, %v937
    %939 = vdwg.mxu0
    %940 = vmatprep.subr.bf16.mxu0 %v772
    %941 = vmatpush1.bf16.msra.mxu0 %v771
    %942 = vmatprep.subr.bf16.mxu0 %v776
    %943 = vmatpush1.bf16.msra.mxu0 %v775
    %944 = vmatprep.subr.bf16.mxu0 %v780
    %945 = vmatpush1.bf16.msra.mxu0 %v779
    %946 = vmatprep.subr.bf16.mxu0 %v784
    %947 = vmatpush1.bf16.msra.mxu0 %v783
    %948 = vmatprep.subr.bf16.mxu0 %v788
    %949 = vmatpush1.bf16.msra.mxu0 %v787
    %950 = vmatprep.subr.bf16.mxu0 %v792
    %951 = vmatpush1.bf16.msra.mxu0 %v791
    %952 = vmatprep.subr.bf16.mxu0 %v796
    %953 = vmatpush1.bf16.msra.mxu0 %v795
    %954 = vmatprep.subr.bf16.mxu0 %v800
    %955 = vmatpush1.bf16.msra.mxu0 %v799
    %956 = vmatprep.subr.bf16.mxu0 %v804
    %957 = vmatpush1.bf16.msra.mxu0 %v803
    %958 = vmatprep.subr.bf16.mxu0 %v808
    %959 = vmatpush1.bf16.msra.mxu0 %v807
    %960 = vmatprep.subr.bf16.mxu0 %v812
    %961 = vmatpush1.bf16.msra.mxu0 %v811
    %962 = vmatprep.subr.bf16.mxu0 %v816
    %963 = vmatpush1.bf16.msra.mxu0 %v815
    %964 = vmatprep.subr.bf16.mxu0 %v820
    %965 = vmatpush1.bf16.msra.mxu0 %v819
    %966 = vmatprep.subr.bf16.mxu0 %v824
    %967 = vmatpush1.bf16.msra.mxu0 %v823
    %968 = vmatprep.subr.bf16.mxu0 %v828
    %969 = vmatpush1.bf16.msra.mxu0 %v827
    %970 = vmatprep.subr.bf16.mxu0 %v832
    %971 = vmatpush1.bf16.msra.mxu0 %v831
    %972 = vmatprep.mubr.bf16.mxu0 %v490
    %973 = vmatmul.mubr.bf16.gmra.mrb[0].mxu0 %v489
    %v974 = vpop.f32.mrb[0].mxu0
    %v975 = vadd.f32 %v568, %v974
    %v976 = vpop.f32.mrb[0].mxu0
    %v977 = vadd.f32 %v572, %v976
    %v978 = vpop.f32.mrb[0].mxu0
    %v979 = vadd.f32 %v568, %v978
    %v980 = vpop.f32.mrb[0].mxu0
    %v981 = vadd.f32 %v572, %v980
    %982 = vdwg.mxu0
    %v983 = vmax.f32 %v932, 0.0
    %v984 = vmax.f32 %v934, 0.0
    %v985 = vmax.f32 %v975, 0.0
    %v986 = vmax.f32 %v977, 0.0
    %v987 = vmax.f32 %v936, 0.0
    %v988 = vmax.f32 %v938, 0.0
    %v989 = vmax.f32 %v979, 0.0
    %v990 = vmax.f32 %v981, 0.0
    %v991 = vpack.c.bf16 %v987, %v983
    %v992 = vpack.c.bf16 %v988, %v984
    %v993 = vpack.c.bf16 %v989, %v985
    %v994 = vpack.c.bf16 %v990, %v986
    %v995 = vld [vmem:[#allocation7] sm:$0xff]
    %v996 = vld [vmem:[#allocation7 + $0x8] sm:$0xff]
    %v997 = vld [vmem:[#allocation7 + $0x10] sm:$0xff]
    %v998 = vld [vmem:[#allocation7 + $0x18] sm:$0xff]
    %v999 = vld [vmem:[#allocation7 + $0x20] sm:$0xff]
    %v1000 = vld [vmem:[#allocation7 + $0x28] sm:$0xff]
    %v1001 = vld [vmem:[#allocation7 + $0x30] sm:$0xff]
    %v1002 = vld [vmem:[#allocation7 + $0x38] sm:$0xff]
    %v1003 = vld [vmem:[#allocation7 + $0x40] sm:$0xff]
    %v1004 = vld [vmem:[#allocation7 + $0x48] sm:$0xff]
    %v1005 = vld [vmem:[#allocation7 + $0x50] sm:$0xff]
    %v1006 = vld [vmem:[#allocation7 + $0x58] sm:$0xff]
    %v1007 = vld [vmem:[#allocation7 + $0x60] sm:$0xff]
    %v1008 = vld [vmem:[#allocation7 + $0x68] sm:$0xff]
    %v1009 = vld [vmem:[#allocation7 + $0x70] sm:$0xff]
    %v1010 = vld [vmem:[#allocation7 + $0x78] sm:$0xff]
    %v1011 = vld [vmem:[#allocation7 + $0x80] sm:$0xff]
    %v1012 = vld [vmem:[#allocation7 + $0x88] sm:$0xff]
    %v1013 = vld [vmem:[#allocation7 + $0x90] sm:$0xff]
    %v1014 = vld [vmem:[#allocation7 + $0x98] sm:$0xff]
    %v1015 = vld [vmem:[#allocation7 + $0xa0] sm:$0xff]
    %v1016 = vld [vmem:[#allocation7 + $0xa8] sm:$0xff]
    %v1017 = vld [vmem:[#allocation7 + $0xb0] sm:$0xff]
    %v1018 = vld [vmem:[#allocation7 + $0xb8] sm:$0xff]
    %v1019 = vld [vmem:[#allocation7 + $0xc0] sm:$0xff]
    %v1020 = vld [vmem:[#allocation7 + $0xc8] sm:$0xff]
    %v1021 = vld [vmem:[#allocation7 + $0xd0] sm:$0xff]
    %v1022 = vld [vmem:[#allocation7 + $0xd8] sm:$0xff]
    %v1023 = vld [vmem:[#allocation7 + $0xe0] sm:$0xff]
    %v1024 = vld [vmem:[#allocation7 + $0xe8] sm:$0xff]
    %v1025 = vld [vmem:[#allocation7 + $0xf0] sm:$0xff]
    %v1026 = vld [vmem:[#allocation7 + $0xf8] sm:$0xff]
    %v1027 = vld [vmem:[#allocation7 + $0x100] sm:$0xff]
    %v1028 = vld [vmem:[#allocation7 + $0x108] sm:$0xff]
    %v1029 = vld [vmem:[#allocation7 + $0x110] sm:$0xff]
    %v1030 = vld [vmem:[#allocation7 + $0x118] sm:$0xff]
    %v1031 = vld [vmem:[#allocation7 + $0x120] sm:$0xff]
    %v1032 = vld [vmem:[#allocation7 + $0x128] sm:$0xff]
    %v1033 = vld [vmem:[#allocation7 + $0x130] sm:$0xff]
    %v1034 = vld [vmem:[#allocation7 + $0x138] sm:$0xff]
    %v1035 = vld [vmem:[#allocation7 + $0x140] sm:$0xff]
    %v1036 = vld [vmem:[#allocation7 + $0x148] sm:$0xff]
    %v1037 = vld [vmem:[#allocation7 + $0x150] sm:$0xff]
    %v1038 = vld [vmem:[#allocation7 + $0x158] sm:$0xff]
    %v1039 = vld [vmem:[#allocation7 + $0x160] sm:$0xff]
    %v1040 = vld [vmem:[#allocation7 + $0x168] sm:$0xff]
    %v1041 = vld [vmem:[#allocation7 + $0x170] sm:$0xff]
    %v1042 = vld [vmem:[#allocation7 + $0x178] sm:$0xff]
    %v1043 = vld [vmem:[#allocation7 + $0x180] sm:$0xff]
    %v1044 = vld [vmem:[#allocation7 + $0x188] sm:$0xff]
    %v1045 = vld [vmem:[#allocation7 + $0x190] sm:$0xff]
    %v1046 = vld [vmem:[#allocation7 + $0x198] sm:$0xff]
    %v1047 = vld [vmem:[#allocation7 + $0x1a0] sm:$0xff]
    %v1048 = vld [vmem:[#allocation7 + $0x1a8] sm:$0xff]
    %v1049 = vld [vmem:[#allocation7 + $0x1b0] sm:$0xff]
    %v1050 = vld [vmem:[#allocation7 + $0x1b8] sm:$0xff]
    %v1051 = vld [vmem:[#allocation7 + $0x1c0] sm:$0xff]
    %v1052 = vld [vmem:[#allocation7 + $0x1c8] sm:$0xff]
    %v1053 = vld [vmem:[#allocation7 + $0x1d0] sm:$0xff]
    %v1054 = vld [vmem:[#allocation7 + $0x1d8] sm:$0xff]
    %v1055 = vld [vmem:[#allocation7 + $0x1e0] sm:$0xff]
    %v1056 = vld [vmem:[#allocation7 + $0x1e8] sm:$0xff]
    %v1057 = vld [vmem:[#allocation7 + $0x1f0] sm:$0xff]
    %v1058 = vld [vmem:[#allocation7 + $0x1f8] sm:$0xff]
    %v1059 = vld [vmem:[#allocation7 + $0x200] sm:$0xff]
    %v1060 = vld [vmem:[#allocation7 + $0x208] sm:$0xff]
    %v1061 = vld [vmem:[#allocation7 + $0x210] sm:$0xff]
    %v1062 = vld [vmem:[#allocation7 + $0x218] sm:$0xff]
    %v1063 = vld [vmem:[#allocation7 + $0x220] sm:$0xff]
    %v1064 = vld [vmem:[#allocation7 + $0x228] sm:$0xff]
    %v1065 = vld [vmem:[#allocation7 + $0x230] sm:$0xff]
    %v1066 = vld [vmem:[#allocation7 + $0x238] sm:$0xff]
    %v1067 = vld [vmem:[#allocation7 + $0x240] sm:$0xff]
    %v1068 = vld [vmem:[#allocation7 + $0x248] sm:$0xff]
    %v1069 = vld [vmem:[#allocation7 + $0x250] sm:$0xff]
    %v1070 = vld [vmem:[#allocation7 + $0x258] sm:$0xff]
    %v1071 = vld [vmem:[#allocation7 + $0x260] sm:$0xff]
    %v1072 = vld [vmem:[#allocation7 + $0x268] sm:$0xff]
    %v1073 = vld [vmem:[#allocation7 + $0x270] sm:$0xff]
    %v1074 = vld [vmem:[#allocation7 + $0x278] sm:$0xff]
    %v1075 = vld [vmem:[#allocation7 + $0x280] sm:$0xff]
    %v1076 = vld [vmem:[#allocation7 + $0x288] sm:$0xff]
    %v1077 = vld [vmem:[#allocation7 + $0x290] sm:$0xff]
    %v1078 = vld [vmem:[#allocation7 + $0x298] sm:$0xff]
    %v1079 = vld [vmem:[#allocation7 + $0x2a0] sm:$0xff]
    %v1080 = vld [vmem:[#allocation7 + $0x2a8] sm:$0xff]
    %v1081 = vld [vmem:[#allocation7 + $0x2b0] sm:$0xff]
    %v1082 = vld [vmem:[#allocation7 + $0x2b8] sm:$0xff]
    %v1083 = vld [vmem:[#allocation7 + $0x2c0] sm:$0xff]
    %v1084 = vld [vmem:[#allocation7 + $0x2c8] sm:$0xff]
    %v1085 = vld [vmem:[#allocation7 + $0x2d0] sm:$0xff]
    %v1086 = vld [vmem:[#allocation7 + $0x2d8] sm:$0xff]
    %v1087 = vld [vmem:[#allocation7 + $0x2e0] sm:$0xff]
    %v1088 = vld [vmem:[#allocation7 + $0x2e8] sm:$0xff]
    %v1089 = vld [vmem:[#allocation7 + $0x2f0] sm:$0xff]
    %v1090 = vld [vmem:[#allocation7 + $0x2f8] sm:$0xff]
    %v1091 = vld [vmem:[#allocation7 + $0x300] sm:$0xff]
    %v1092 = vld [vmem:[#allocation7 + $0x308] sm:$0xff]
    %v1093 = vld [vmem:[#allocation7 + $0x310] sm:$0xff]
    %v1094 = vld [vmem:[#allocation7 + $0x318] sm:$0xff]
    %v1095 = vld [vmem:[#allocation7 + $0x320] sm:$0xff]
    %v1096 = vld [vmem:[#allocation7 + $0x328] sm:$0xff]
    %v1097 = vld [vmem:[#allocation7 + $0x330] sm:$0xff]
    %v1098 = vld [vmem:[#allocation7 + $0x338] sm:$0xff]
    %v1099 = vld [vmem:[#allocation7 + $0x340] sm:$0xff]
    %v1100 = vld [vmem:[#allocation7 + $0x348] sm:$0xff]
    %v1101 = vld [vmem:[#allocation7 + $0x350] sm:$0xff]
    %v1102 = vld [vmem:[#allocation7 + $0x358] sm:$0xff]
    %v1103 = vld [vmem:[#allocation7 + $0x360] sm:$0xff]
    %v1104 = vld [vmem:[#allocation7 + $0x368] sm:$0xff]
    %v1105 = vld [vmem:[#allocation7 + $0x370] sm:$0xff]
    %v1106 = vld [vmem:[#allocation7 + $0x378] sm:$0xff]
    %v1107 = vld [vmem:[#allocation7 + $0x380] sm:$0xff]
    %v1108 = vld [vmem:[#allocation7 + $0x388] sm:$0xff]
    %v1109 = vld [vmem:[#allocation7 + $0x390] sm:$0xff]
    %v1110 = vld [vmem:[#allocation7 + $0x398] sm:$0xff]
    %v1111 = vld [vmem:[#allocation7 + $0x3a0] sm:$0xff]
    %v1112 = vld [vmem:[#allocation7 + $0x3a8] sm:$0xff]
    %v1113 = vld [vmem:[#allocation7 + $0x3b0] sm:$0xff]
    %v1114 = vld [vmem:[#allocation7 + $0x3b8] sm:$0xff]
    %v1115 = vld [vmem:[#allocation7 + $0x3c0] sm:$0xff]
    %v1116 = vld [vmem:[#allocation7 + $0x3c8] sm:$0xff]
    %v1117 = vld [vmem:[#allocation7 + $0x3d0] sm:$0xff]
    %v1118 = vld [vmem:[#allocation7 + $0x3d8] sm:$0xff]
    %v1119 = vld [vmem:[#allocation7 + $0x3e0] sm:$0xff]
    %v1120 = vld [vmem:[#allocation7 + $0x3e8] sm:$0xff]
    %v1121 = vld [vmem:[#allocation7 + $0x3f0] sm:$0xff]
    %v1122 = vld [vmem:[#allocation7 + $0x3f8] sm:$0xff]
    %v1123 = vld [vmem:[%s8] sm:$0xf]
    %v1125 = vlaneseq
    %v1126 = vshrl.u32 %v1125, 7
    %v1127 = vsub.s32 0, %v1126
    %v1128 = vrot.slane %v1123, %v1127
    %v1129 = vlaneseq
    %v1130 = vshrl.u32 %v1129, 7
    %v1131 = vsub.s32 1, %v1130
    %v1132 = vrot.slane %v1123, %v1131
    %v1133 = vlaneseq
    %v1134 = vshrl.u32 %v1133, 7
    %v1135 = vsub.s32 2, %v1134
    %v1136 = vrot.slane %v1123, %v1135
    %v1137 = vlaneseq
    %v1138 = vshrl.u32 %v1137, 7
    %v1139 = vsub.s32 3, %v1138
    %v1140 = vrot.slane %v1123, %v1139
    %v1273 = vunpack.c.l.b16 %v995
    %v1274 = vunpack.c.h.b16 %v995
    %v1275 = vunpack.c.l.b16 %v996
    %v1276 = vunpack.c.h.b16 %v996
    %v1277 = vunpack.c.l.b16 %v997
    %v1278 = vunpack.c.h.b16 %v997
    %v1279 = vunpack.c.l.b16 %v998
    %v1280 = vunpack.c.h.b16 %v998
    %v1281 = vunpack.c.l.b16 %v999
    %v1282 = vunpack.c.h.b16 %v999
    %v1283 = vunpack.c.l.b16 %v1000
    %v1284 = vunpack.c.h.b16 %v1000
    %v1285 = vunpack.c.l.b16 %v1001
    %v1286 = vunpack.c.h.b16 %v1001
    %v1287 = vunpack.c.l.b16 %v1002
    %v1288 = vunpack.c.h.b16 %v1002
    %v1289 = vunpack.c.l.b16 %v1003
    %v1290 = vunpack.c.h.b16 %v1003
    %v1291 = vunpack.c.l.b16 %v1004
    %v1292 = vunpack.c.h.b16 %v1004
    %v1293 = vunpack.c.l.b16 %v1005
    %v1294 = vunpack.c.h.b16 %v1005
    %v1295 = vunpack.c.l.b16 %v1006
    %v1296 = vunpack.c.h.b16 %v1006
    %v1297 = vunpack.c.l.b16 %v1007
    %v1298 = vunpack.c.h.b16 %v1007
    %v1299 = vunpack.c.l.b16 %v1008
    %v1300 = vunpack.c.h.b16 %v1008
    %v1301 = vunpack.c.l.b16 %v1009
    %v1302 = vunpack.c.h.b16 %v1009
    %v1303 = vunpack.c.l.b16 %v1010
    %v1304 = vunpack.c.h.b16 %v1010
    %v1305 = vunpack.c.l.b16 %v1011
    %v1306 = vunpack.c.h.b16 %v1011
    %v1307 = vunpack.c.l.b16 %v1012
    %v1308 = vunpack.c.h.b16 %v1012
    %v1309 = vunpack.c.l.b16 %v1013
    %v1310 = vunpack.c.h.b16 %v1013
    %v1311 = vunpack.c.l.b16 %v1014
    %v1312 = vunpack.c.h.b16 %v1014
    %v1313 = vunpack.c.l.b16 %v1015
    %v1314 = vunpack.c.h.b16 %v1015
    %v1315 = vunpack.c.l.b16 %v1016
    %v1316 = vunpack.c.h.b16 %v1016
    %v1317 = vunpack.c.l.b16 %v1017
    %v1318 = vunpack.c.h.b16 %v1017
    %v1319 = vunpack.c.l.b16 %v1018
    %v1320 = vunpack.c.h.b16 %v1018
    %v1321 = vunpack.c.l.b16 %v1019
    %v1322 = vunpack.c.h.b16 %v1019
    %v1323 = vunpack.c.l.b16 %v1020
    %v1324 = vunpack.c.h.b16 %v1020
    %v1325 = vunpack.c.l.b16 %v1021
    %v1326 = vunpack.c.h.b16 %v1021
    %v1327 = vunpack.c.l.b16 %v1022
    %v1328 = vunpack.c.h.b16 %v1022
    %v1329 = vunpack.c.l.b16 %v1023
    %v1330 = vunpack.c.h.b16 %v1023
    %v1331 = vunpack.c.l.b16 %v1024
    %v1332 = vunpack.c.h.b16 %v1024
    %v1333 = vunpack.c.l.b16 %v1025
    %v1334 = vunpack.c.h.b16 %v1025
    %v1335 = vunpack.c.l.b16 %v1026
    %v1336 = vunpack.c.h.b16 %v1026
    %v1337 = vunpack.c.l.b16 %v1027
    %v1338 = vunpack.c.h.b16 %v1027
    %v1339 = vunpack.c.l.b16 %v1028
    %v1340 = vunpack.c.h.b16 %v1028
    %v1341 = vunpack.c.l.b16 %v1029
    %v1342 = vunpack.c.h.b16 %v1029
    %v1343 = vunpack.c.l.b16 %v1030
    %v1344 = vunpack.c.h.b16 %v1030
    %v1345 = vunpack.c.l.b16 %v1031
    %v1346 = vunpack.c.h.b16 %v1031
    %v1347 = vunpack.c.l.b16 %v1032
    %v1348 = vunpack.c.h.b16 %v1032
    %v1349 = vunpack.c.l.b16 %v1033
    %v1350 = vunpack.c.h.b16 %v1033
    %v1351 = vunpack.c.l.b16 %v1034
    %v1352 = vunpack.c.h.b16 %v1034
    %v1353 = vunpack.c.l.b16 %v1035
    %v1354 = vunpack.c.h.b16 %v1035
    %v1355 = vunpack.c.l.b16 %v1036
    %v1356 = vunpack.c.h.b16 %v1036
    %v1357 = vunpack.c.l.b16 %v1037
    %v1358 = vunpack.c.h.b16 %v1037
    %v1359 = vunpack.c.l.b16 %v1038
    %v1360 = vunpack.c.h.b16 %v1038
    %v1361 = vunpack.c.l.b16 %v1039
    %v1362 = vunpack.c.h.b16 %v1039
    %v1363 = vunpack.c.l.b16 %v1040
    %v1364 = vunpack.c.h.b16 %v1040
    %v1365 = vunpack.c.l.b16 %v1041
    %v1366 = vunpack.c.h.b16 %v1041
    %v1367 = vunpack.c.l.b16 %v1042
    %v1368 = vunpack.c.h.b16 %v1042
    %v1369 = vunpack.c.l.b16 %v1043
    %v1370 = vunpack.c.h.b16 %v1043
    %v1371 = vunpack.c.l.b16 %v1044
    %v1372 = vunpack.c.h.b16 %v1044
    %v1373 = vunpack.c.l.b16 %v1045
    %v1374 = vunpack.c.h.b16 %v1045
    %v1375 = vunpack.c.l.b16 %v1046
    %v1376 = vunpack.c.h.b16 %v1046
    %v1377 = vunpack.c.l.b16 %v1047
    %v1378 = vunpack.c.h.b16 %v1047
    %v1379 = vunpack.c.l.b16 %v1048
    %v1380 = vunpack.c.h.b16 %v1048
    %v1381 = vunpack.c.l.b16 %v1049
    %v1382 = vunpack.c.h.b16 %v1049
    %v1383 = vunpack.c.l.b16 %v1050
    %v1384 = vunpack.c.h.b16 %v1050
    %v1385 = vunpack.c.l.b16 %v1051
    %v1386 = vunpack.c.h.b16 %v1051
    %v1387 = vunpack.c.l.b16 %v1052
    %v1388 = vunpack.c.h.b16 %v1052
    %v1389 = vunpack.c.l.b16 %v1053
    %v1390 = vunpack.c.h.b16 %v1053
    %v1391 = vunpack.c.l.b16 %v1054
    %v1392 = vunpack.c.h.b16 %v1054
    %v1393 = vunpack.c.l.b16 %v1055
    %v1394 = vunpack.c.h.b16 %v1055
    %v1395 = vunpack.c.l.b16 %v1056
    %v1396 = vunpack.c.h.b16 %v1056
    %v1397 = vunpack.c.l.b16 %v1057
    %v1398 = vunpack.c.h.b16 %v1057
    %v1399 = vunpack.c.l.b16 %v1058
    %v1400 = vunpack.c.h.b16 %v1058
    %v1401 = vunpack.c.l.b16 %v1059
    %v1402 = vunpack.c.h.b16 %v1059
    %v1403 = vunpack.c.l.b16 %v1060
    %v1404 = vunpack.c.h.b16 %v1060
    %v1405 = vunpack.c.l.b16 %v1061
    %v1406 = vunpack.c.h.b16 %v1061
    %v1407 = vunpack.c.l.b16 %v1062
    %v1408 = vunpack.c.h.b16 %v1062
    %v1409 = vunpack.c.l.b16 %v1063
    %v1410 = vunpack.c.h.b16 %v1063
    %v1411 = vunpack.c.l.b16 %v1064
    %v1412 = vunpack.c.h.b16 %v1064
    %v1413 = vunpack.c.l.b16 %v1065
    %v1414 = vunpack.c.h.b16 %v1065
    %v1415 = vunpack.c.l.b16 %v1066
    %v1416 = vunpack.c.h.b16 %v1066
    %v1417 = vunpack.c.l.b16 %v1067
    %v1418 = vunpack.c.h.b16 %v1067
    %v1419 = vunpack.c.l.b16 %v1068
    %v1420 = vunpack.c.h.b16 %v1068
    %v1421 = vunpack.c.l.b16 %v1069
    %v1422 = vunpack.c.h.b16 %v1069
    %v1423 = vunpack.c.l.b16 %v1070
    %v1424 = vunpack.c.h.b16 %v1070
    %v1425 = vunpack.c.l.b16 %v1071
    %v1426 = vunpack.c.h.b16 %v1071
    %v1427 = vunpack.c.l.b16 %v1072
    %v1428 = vunpack.c.h.b16 %v1072
    %v1429 = vunpack.c.l.b16 %v1073
    %v1430 = vunpack.c.h.b16 %v1073
    %v1431 = vunpack.c.l.b16 %v1074
    %v1432 = vunpack.c.h.b16 %v1074
    %v1433 = vunpack.c.l.b16 %v1075
    %v1434 = vunpack.c.h.b16 %v1075
    %v1435 = vunpack.c.l.b16 %v1076
    %v1436 = vunpack.c.h.b16 %v1076
    %v1437 = vunpack.c.l.b16 %v1077
    %v1438 = vunpack.c.h.b16 %v1077
    %v1439 = vunpack.c.l.b16 %v1078
    %v1440 = vunpack.c.h.b16 %v1078
    %v1441 = vunpack.c.l.b16 %v1079
    %v1442 = vunpack.c.h.b16 %v1079
    %v1443 = vunpack.c.l.b16 %v1080
    %v1444 = vunpack.c.h.b16 %v1080
    %v1445 = vunpack.c.l.b16 %v1081
    %v1446 = vunpack.c.h.b16 %v1081
    %v1447 = vunpack.c.l.b16 %v1082
    %v1448 = vunpack.c.h.b16 %v1082
    %v1449 = vunpack.c.l.b16 %v1083
    %v1450 = vunpack.c.h.b16 %v1083
    %v1451 = vunpack.c.l.b16 %v1084
    %v1452 = vunpack.c.h.b16 %v1084
    %v1453 = vunpack.c.l.b16 %v1085
    %v1454 = vunpack.c.h.b16 %v1085
    %v1455 = vunpack.c.l.b16 %v1086
    %v1456 = vunpack.c.h.b16 %v1086
    %v1457 = vunpack.c.l.b16 %v1087
    %v1458 = vunpack.c.h.b16 %v1087
    %v1459 = vunpack.c.l.b16 %v1088
    %v1460 = vunpack.c.h.b16 %v1088
    %v1461 = vunpack.c.l.b16 %v1089
    %v1462 = vunpack.c.h.b16 %v1089
    %v1463 = vunpack.c.l.b16 %v1090
    %v1464 = vunpack.c.h.b16 %v1090
    %v1465 = vunpack.c.l.b16 %v1091
    %v1466 = vunpack.c.h.b16 %v1091
    %v1467 = vunpack.c.l.b16 %v1092
    %v1468 = vunpack.c.h.b16 %v1092
    %v1469 = vunpack.c.l.b16 %v1093
    %v1470 = vunpack.c.h.b16 %v1093
    %v1471 = vunpack.c.l.b16 %v1094
    %v1472 = vunpack.c.h.b16 %v1094
    %v1473 = vunpack.c.l.b16 %v1095
    %v1474 = vunpack.c.h.b16 %v1095
    %v1475 = vunpack.c.l.b16 %v1096
    %v1476 = vunpack.c.h.b16 %v1096
    %v1477 = vunpack.c.l.b16 %v1097
    %v1478 = vunpack.c.h.b16 %v1097
    %v1479 = vunpack.c.l.b16 %v1098
    %v1480 = vunpack.c.h.b16 %v1098
    %v1481 = vunpack.c.l.b16 %v1099
    %v1482 = vunpack.c.h.b16 %v1099
    %v1483 = vunpack.c.l.b16 %v1100
    %v1484 = vunpack.c.h.b16 %v1100
    %v1485 = vunpack.c.l.b16 %v1101
    %v1486 = vunpack.c.h.b16 %v1101
    %v1487 = vunpack.c.l.b16 %v1102
    %v1488 = vunpack.c.h.b16 %v1102
    %v1489 = vunpack.c.l.b16 %v1103
    %v1490 = vunpack.c.h.b16 %v1103
    %v1491 = vunpack.c.l.b16 %v1104
    %v1492 = vunpack.c.h.b16 %v1104
    %v1493 = vunpack.c.l.b16 %v1105
    %v1494 = vunpack.c.h.b16 %v1105
    %v1495 = vunpack.c.l.b16 %v1106
    %v1496 = vunpack.c.h.b16 %v1106
    %v1497 = vunpack.c.l.b16 %v1107
    %v1498 = vunpack.c.h.b16 %v1107
    %v1499 = vunpack.c.l.b16 %v1108
    %v1500 = vunpack.c.h.b16 %v1108
    %v1501 = vunpack.c.l.b16 %v1109
    %v1502 = vunpack.c.h.b16 %v1109
    %v1503 = vunpack.c.l.b16 %v1110
    %v1504 = vunpack.c.h.b16 %v1110
    %v1505 = vunpack.c.l.b16 %v1111
    %v1506 = vunpack.c.h.b16 %v1111
    %v1507 = vunpack.c.l.b16 %v1112
    %v1508 = vunpack.c.h.b16 %v1112
    %v1509 = vunpack.c.l.b16 %v1113
    %v1510 = vunpack.c.h.b16 %v1113
    %v1511 = vunpack.c.l.b16 %v1114
    %v1512 = vunpack.c.h.b16 %v1114
    %v1513 = vunpack.c.l.b16 %v1115
    %v1514 = vunpack.c.h.b16 %v1115
    %v1515 = vunpack.c.l.b16 %v1116
    %v1516 = vunpack.c.h.b16 %v1116
    %v1517 = vunpack.c.l.b16 %v1117
    %v1518 = vunpack.c.h.b16 %v1117
    %v1519 = vunpack.c.l.b16 %v1118
    %v1520 = vunpack.c.h.b16 %v1118
    %v1521 = vunpack.c.l.b16 %v1119
    %v1522 = vunpack.c.h.b16 %v1119
    %v1523 = vunpack.c.l.b16 %v1120
    %v1524 = vunpack.c.h.b16 %v1120
    %v1525 = vunpack.c.l.b16 %v1121
    %v1526 = vunpack.c.h.b16 %v1121
    %v1527 = vunpack.c.l.b16 %v1122
    %v1528 = vunpack.c.h.b16 %v1122
    %v1529 = vpack.c.b16 %v1277, %v1273
    %v1530 = vpack.c.b16 %v1278, %v1274
    %v1531 = vpack.c.b16 %v1279, %v1275
    %v1532 = vpack.c.b16 %v1280, %v1276
    %v1533 = vpack.c.b16 %v1285, %v1281
    %v1534 = vpack.c.b16 %v1286, %v1282
    %v1535 = vpack.c.b16 %v1287, %v1283
    %v1536 = vpack.c.b16 %v1288, %v1284
    %v1537 = vpack.c.b16 %v1293, %v1289
    %v1538 = vpack.c.b16 %v1294, %v1290
    %v1539 = vpack.c.b16 %v1295, %v1291
    %v1540 = vpack.c.b16 %v1296, %v1292
    %v1541 = vpack.c.b16 %v1301, %v1297
    %v1542 = vpack.c.b16 %v1302, %v1298
    %v1543 = vpack.c.b16 %v1303, %v1299
    %v1544 = vpack.c.b16 %v1304, %v1300
    %v1545 = vpack.c.b16 %v1309, %v1305
    %v1546 = vpack.c.b16 %v1310, %v1306
    %v1547 = vpack.c.b16 %v1311, %v1307
    %v1548 = vpack.c.b16 %v1312, %v1308
    %v1549 = vpack.c.b16 %v1317, %v1313
    %v1550 = vpack.c.b16 %v1318, %v1314
    %v1551 = vpack.c.b16 %v1319, %v1315
    %v1552 = vpack.c.b16 %v1320, %v1316
    %v1553 = vpack.c.b16 %v1325, %v1321
    %v1554 = vpack.c.b16 %v1326, %v1322
    %v1555 = vpack.c.b16 %v1327, %v1323
    %v1556 = vpack.c.b16 %v1328, %v1324
    %v1557 = vpack.c.b16 %v1333, %v1329
    %v1558 = vpack.c.b16 %v1334, %v1330
    %v1559 = vpack.c.b16 %v1335, %v1331
    %v1560 = vpack.c.b16 %v1336, %v1332
    %v1561 = vpack.c.b16 %v1341, %v1337
    %v1562 = vpack.c.b16 %v1342, %v1338
    %v1563 = vpack.c.b16 %v1343, %v1339
    %v1564 = vpack.c.b16 %v1344, %v1340
    %v1565 = vpack.c.b16 %v1349, %v1345
    %v1566 = vpack.c.b16 %v1350, %v1346
    %v1567 = vpack.c.b16 %v1351, %v1347
    %v1568 = vpack.c.b16 %v1352, %v1348
    %v1569 = vpack.c.b16 %v1357, %v1353
    %v1570 = vpack.c.b16 %v1358, %v1354
    %v1571 = vpack.c.b16 %v1359, %v1355
    %v1572 = vpack.c.b16 %v1360, %v1356
    %v1573 = vpack.c.b16 %v1365, %v1361
    %v1574 = vpack.c.b16 %v1366, %v1362
    %v1575 = vpack.c.b16 %v1367, %v1363
    %v1576 = vpack.c.b16 %v1368, %v1364
    %v1577 = vpack.c.b16 %v1373, %v1369
    %v1578 = vpack.c.b16 %v1374, %v1370
    %v1579 = vpack.c.b16 %v1375, %v1371
    %v1580 = vpack.c.b16 %v1376, %v1372
    %v1581 = vpack.c.b16 %v1381, %v1377
    %v1582 = vpack.c.b16 %v1382, %v1378
    %v1583 = vpack.c.b16 %v1383, %v1379
    %v1584 = vpack.c.b16 %v1384, %v1380
    %v1585 = vpack.c.b16 %v1389, %v1385
    %v1586 = vpack.c.b16 %v1390, %v1386
    %v1587 = vpack.c.b16 %v1391, %v1387
    %v1588 = vpack.c.b16 %v1392, %v1388
    %v1589 = vpack.c.b16 %v1397, %v1393
    %v1590 = vpack.c.b16 %v1398, %v1394
    %v1591 = vpack.c.b16 %v1399, %v1395
    %v1592 = vpack.c.b16 %v1400, %v1396
    %v1593 = vpack.c.b16 %v1405, %v1401
    %v1594 = vpack.c.b16 %v1406, %v1402
    %v1595 = vpack.c.b16 %v1407, %v1403
    %v1596 = vpack.c.b16 %v1408, %v1404
    %v1597 = vpack.c.b16 %v1413, %v1409
    %v1598 = vpack.c.b16 %v1414, %v1410
    %v1599 = vpack.c.b16 %v1415, %v1411
    %v1600 = vpack.c.b16 %v1416, %v1412
    %v1601 = vpack.c.b16 %v1421, %v1417
    %v1602 = vpack.c.b16 %v1422, %v1418
    %v1603 = vpack.c.b16 %v1423, %v1419
    %v1604 = vpack.c.b16 %v1424, %v1420
    %v1605 = vpack.c.b16 %v1429, %v1425
    %v1606 = vpack.c.b16 %v1430, %v1426
    %v1607 = vpack.c.b16 %v1431, %v1427
    %v1608 = vpack.c.b16 %v1432, %v1428
    %v1609 = vpack.c.b16 %v1437, %v1433
    %v1610 = vpack.c.b16 %v1438, %v1434
    %v1611 = vpack.c.b16 %v1439, %v1435
    %v1612 = vpack.c.b16 %v1440, %v1436
    %v1613 = vpack.c.b16 %v1445, %v1441
    %v1614 = vpack.c.b16 %v1446, %v1442
    %v1615 = vpack.c.b16 %v1447, %v1443
    %v1616 = vpack.c.b16 %v1448, %v1444
    %v1617 = vpack.c.b16 %v1453, %v1449
    %v1618 = vpack.c.b16 %v1454, %v1450
    %v1619 = vpack.c.b16 %v1455, %v1451
    %v1620 = vpack.c.b16 %v1456, %v1452
    %v1621 = vpack.c.b16 %v1461, %v1457
    %v1622 = vpack.c.b16 %v1462, %v1458
    %v1623 = vpack.c.b16 %v1463, %v1459
    %v1624 = vpack.c.b16 %v1464, %v1460
    %v1625 = vpack.c.b16 %v1469, %v1465
    %v1626 = vpack.c.b16 %v1470, %v1466
    %v1627 = vpack.c.b16 %v1471, %v1467
    %v1628 = vpack.c.b16 %v1472, %v1468
    %v1629 = vpack.c.b16 %v1477, %v1473
    %v1630 = vpack.c.b16 %v1478, %v1474
    %v1631 = vpack.c.b16 %v1479, %v1475
    %v1632 = vpack.c.b16 %v1480, %v1476
    %v1633 = vpack.c.b16 %v1485, %v1481
    %v1634 = vpack.c.b16 %v1486, %v1482
    %v1635 = vpack.c.b16 %v1487, %v1483
    %v1636 = vpack.c.b16 %v1488, %v1484
    %v1637 = vpack.c.b16 %v1493, %v1489
    %v1638 = vpack.c.b16 %v1494, %v1490
    %v1639 = vpack.c.b16 %v1495, %v1491
    %v1640 = vpack.c.b16 %v1496, %v1492
    %v1641 = vpack.c.b16 %v1501, %v1497
    %v1642 = vpack.c.b16 %v1502, %v1498
    %v1643 = vpack.c.b16 %v1503, %v1499
    %v1644 = vpack.c.b16 %v1504, %v1500
    %v1645 = vpack.c.b16 %v1509, %v1505
    %v1646 = vpack.c.b16 %v1510, %v1506
    %v1647 = vpack.c.b16 %v1511, %v1507
    %v1648 = vpack.c.b16 %v1512, %v1508
    %v1649 = vpack.c.b16 %v1517, %v1513
    %v1650 = vpack.c.b16 %v1518, %v1514
    %v1651 = vpack.c.b16 %v1519, %v1515
    %v1652 = vpack.c.b16 %v1520, %v1516
    %v1653 = vpack.c.b16 %v1525, %v1521
    %v1654 = vpack.c.b16 %v1526, %v1522
    %v1655 = vpack.c.b16 %v1527, %v1523
    %v1656 = vpack.c.b16 %v1528, %v1524
    %1785 = vmatprep.subr.bf16.mxu0 %v1530
    %1786 = vmatpush1.bf16.msra.mxu0 %v1529
    %1787 = vmatprep.subr.bf16.mxu0 %v1534
    %1788 = vmatpush1.bf16.msra.mxu0 %v1533
    %1789 = vmatprep.subr.bf16.mxu0 %v1538
    %1790 = vmatpush1.bf16.msra.mxu0 %v1537
    %1791 = vmatprep.subr.bf16.mxu0 %v1542
    %1792 = vmatpush1.bf16.msra.mxu0 %v1541
    %1793 = vmatprep.subr.bf16.mxu0 %v1546
    %1794 = vmatpush1.bf16.msra.mxu0 %v1545
    %1795 = vmatprep.subr.bf16.mxu0 %v1550
    %1796 = vmatpush1.bf16.msra.mxu0 %v1549
    %1797 = vmatprep.subr.bf16.mxu0 %v1554
    %1798 = vmatpush1.bf16.msra.mxu0 %v1553
    %1799 = vmatprep.subr.bf16.mxu0 %v1558
    %1800 = vmatpush1.bf16.msra.mxu0 %v1557
    %1801 = vmatprep.subr.bf16.mxu0 %v1562
    %1802 = vmatpush1.bf16.msra.mxu0 %v1561
    %1803 = vmatprep.subr.bf16.mxu0 %v1566
    %1804 = vmatpush1.bf16.msra.mxu0 %v1565
    %1805 = vmatprep.subr.bf16.mxu0 %v1570
    %1806 = vmatpush1.bf16.msra.mxu0 %v1569
    %1807 = vmatprep.subr.bf16.mxu0 %v1574
    %1808 = vmatpush1.bf16.msra.mxu0 %v1573
    %1809 = vmatprep.subr.bf16.mxu0 %v1578
    %1810 = vmatpush1.bf16.msra.mxu0 %v1577
    %1811 = vmatprep.subr.bf16.mxu0 %v1582
    %1812 = vmatpush1.bf16.msra.mxu0 %v1581
    %1813 = vmatprep.subr.bf16.mxu0 %v1586
    %1814 = vmatpush1.bf16.msra.mxu0 %v1585
    %1815 = vmatprep.subr.bf16.mxu0 %v1590
    %1816 = vmatpush1.bf16.msra.mxu0 %v1589
    %1817 = vmatprep.mubr.bf16.mxu0 %v992
    %1818 = vmatmul.mubr.bf16.gmra.mrb[0].mxu0 %v991
    %v1819 = vpop.f32.mrb[0].mxu0
    %v1820 = vadd.f32 %v1128, %v1819
    %v1821 = vpop.f32.mrb[0].mxu0
    %v1822 = vadd.f32 %v1132, %v1821
    %v1823 = vpop.f32.mrb[0].mxu0
    %v1824 = vadd.f32 %v1128, %v1823
    %v1825 = vpop.f32.mrb[0].mxu0
    %v1826 = vadd.f32 %v1132, %v1825
    %1827 = vdwg.mxu0
    %1828 = vmatprep.subr.bf16.mxu0 %v1594
    %1829 = vmatpush1.bf16.msra.mxu0 %v1593
    %1830 = vmatprep.subr.bf16.mxu0 %v1598
    %1831 = vmatpush1.bf16.msra.mxu0 %v1597
    %1832 = vmatprep.subr.bf16.mxu0 %v1602
    %1833 = vmatpush1.bf16.msra.mxu0 %v1601
    %1834 = vmatprep.subr.bf16.mxu0 %v1606
    %1835 = vmatpush1.bf16.msra.mxu0 %v1605
    %1836 = vmatprep.subr.bf16.mxu0 %v1610
    %1837 = vmatpush1.bf16.msra.mxu0 %v1609
    %1838 = vmatprep.subr.bf16.mxu0 %v1614
    %1839 = vmatpush1.bf16.msra.mxu0 %v1613
    %1840 = vmatprep.subr.bf16.mxu0 %v1618
    %1841 = vmatpush1.bf16.msra.mxu0 %v1617
    %1842 = vmatprep.subr.bf16.mxu0 %v1622
    %1843 = vmatpush1.bf16.msra.mxu0 %v1621
    %1844 = vmatprep.subr.bf16.mxu0 %v1626
    %1845 = vmatpush1.bf16.msra.mxu0 %v1625
    %1846 = vmatprep.subr.bf16.mxu0 %v1630
    %1847 = vmatpush1.bf16.msra.mxu0 %v1629
    %1848 = vmatprep.subr.bf16.mxu0 %v1634
    %1849 = vmatpush1.bf16.msra.mxu0 %v1633
    %1850 = vmatprep.subr.bf16.mxu0 %v1638
    %1851 = vmatpush1.bf16.msra.mxu0 %v1637
    %1852 = vmatprep.subr.bf16.mxu0 %v1642
    %1853 = vmatpush1.bf16.msra.mxu0 %v1641
    %1854 = vmatprep.subr.bf16.mxu0 %v1646
    %1855 = vmatpush1.bf16.msra.mxu0 %v1645
    %1856 = vmatprep.subr.bf16.mxu0 %v1650
    %1857 = vmatpush1.bf16.msra.mxu0 %v1649
    %1858 = vmatprep.subr.bf16.mxu0 %v1654
    %1859 = vmatpush1.bf16.msra.mxu0 %v1653
    %1860 = vmatprep.mubr.bf16.mxu0 %v994
    %1861 = vmatmul.mubr.bf16.gmra.mrb[0].mxu0 %v993
    %v1862 = vpop.f32.mrb[0].mxu0
    %v1863 = vadd.f32 %v1820, %v1862
    %v1864 = vpop.f32.mrb[0].mxu0
    %v1865 = vadd.f32 %v1822, %v1864
    %v1866 = vpop.f32.mrb[0].mxu0
    %v1867 = vadd.f32 %v1824, %v1866
    %v1868 = vpop.f32.mrb[0].mxu0
    %v1869 = vadd.f32 %v1826, %v1868
    %1870 = vdwg.mxu0
    %1871 = vmatprep.subr.bf16.mxu0 %v1532
    %1872 = vmatpush1.bf16.msra.mxu0 %v1531
    %1873 = vmatprep.subr.bf16.mxu0 %v1536
    %1874 = vmatpush1.bf16.msra.mxu0 %v1535
    %1875 = vmatprep.subr.bf16.mxu0 %v1540
    %1876 = vmatpush1.bf16.msra.mxu0 %v1539
    %1877 = vmatprep.subr.bf16.mxu0 %v1544
    %1878 = vmatpush1.bf16.msra.mxu0 %v1543
    %1879 = vmatprep.subr.bf16.mxu0 %v1548
    %1880 = vmatpush1.bf16.msra.mxu0 %v1547
    %1881 = vmatprep.subr.bf16.mxu0 %v1552
    %1882 = vmatpush1.bf16.msra.mxu0 %v1551
    %1883 = vmatprep.subr.bf16.mxu0 %v1556
    %1884 = vmatpush1.bf16.msra.mxu0 %v1555
    %1885 = vmatprep.subr.bf16.mxu0 %v1560
    %1886 = vmatpush1.bf16.msra.mxu0 %v1559
    %1887 = vmatprep.subr.bf16.mxu0 %v1564
    %1888 = vmatpush1.bf16.msra.mxu0 %v1563
    %1889 = vmatprep.subr.bf16.mxu0 %v1568
    %1890 = vmatpush1.bf16.msra.mxu0 %v1567
    %1891 = vmatprep.subr.bf16.mxu0 %v1572
    %1892 = vmatpush1.bf16.msra.mxu0 %v1571
    %1893 = vmatprep.subr.bf16.mxu0 %v1576
    %1894 = vmatpush1.bf16.msra.mxu0 %v1575
    %1895 = vmatprep.subr.bf16.mxu0 %v1580
    %1896 = vmatpush1.bf16.msra.mxu0 %v1579
    %1897 = vmatprep.subr.bf16.mxu0 %v1584
    %1898 = vmatpush1.bf16.msra.mxu0 %v1583
    %1899 = vmatprep.subr.bf16.mxu0 %v1588
    %1900 = vmatpush1.bf16.msra.mxu0 %v1587
    %1901 = vmatprep.subr.bf16.mxu0 %v1592
    %1902 = vmatpush1.bf16.msra.mxu0 %v1591
    %1903 = vmatprep.mubr.bf16.mxu0 %v992
    %1904 = vmatmul.mubr.bf16.gmra.mrb[0].mxu0 %v991
    %v1905 = vpop.f32.mrb[0].mxu0
    %v1906 = vadd.f32 %v1136, %v1905
    %v1907 = vpop.f32.mrb[0].mxu0
    %v1908 = vadd.f32 %v1140, %v1907
    %v1909 = vpop.f32.mrb[0].mxu0
    %v1910 = vadd.f32 %v1136, %v1909
    %v1911 = vpop.f32.mrb[0].mxu0
    %v1912 = vadd.f32 %v1140, %v1911
    %1913 = vdwg.mxu0
    %1914 = vmatprep.subr.bf16.mxu0 %v1596
    %1915 = vmatpush1.bf16.msra.mxu0 %v1595
    %1916 = vmatprep.subr.bf16.mxu0 %v1600
    %1917 = vmatpush1.bf16.msra.mxu0 %v1599
    %1918 = vmatprep.subr.bf16.mxu0 %v1604
    %1919 = vmatpush1.bf16.msra.mxu0 %v1603
    %1920 = vmatprep.subr.bf16.mxu0 %v1608
    %1921 = vmatpush1.bf16.msra.mxu0 %v1607
    %1922 = vmatprep.subr.bf16.mxu0 %v1612
    %1923 = vmatpush1.bf16.msra.mxu0 %v1611
    %1924 = vmatprep.subr.bf16.mxu0 %v1616
    %1925 = vmatpush1.bf16.msra.mxu0 %v1615
    %1926 = vmatprep.subr.bf16.mxu0 %v1620
    %1927 = vmatpush1.bf16.msra.mxu0 %v1619
    %1928 = vmatprep.subr.bf16.mxu0 %v1624
    %1929 = vmatpush1.bf16.msra.mxu0 %v1623
    %1930 = vmatprep.subr.bf16.mxu0 %v1628
    %1931 = vmatpush1.bf16.msra.mxu0 %v1627
    %1932 = vmatprep.subr.bf16.mxu0 %v1632
    %1933 = vmatpush1.bf16.msra.mxu0 %v1631
    %1934 = vmatprep.subr.bf16.mxu0 %v1636
    %1935 = vmatpush1.bf16.msra.mxu0 %v1635
    %1936 = vmatprep.subr.bf16.mxu0 %v1640
    %1937 = vmatpush1.bf16.msra.mxu0 %v1639
    %1938 = vmatprep.subr.bf16.mxu0 %v1644
    %1939 = vmatpush1.bf16.msra.mxu0 %v1643
    %1940 = vmatprep.subr.bf16.mxu0 %v1648
    %1941 = vmatpush1.bf16.msra.mxu0 %v1647
    %1942 = vmatprep.subr.bf16.mxu0 %v1652
    %1943 = vmatpush1.bf16.msra.mxu0 %v1651
    %1944 = vmatprep.subr.bf16.mxu0 %v1656
    %1945 = vmatpush1.bf16.msra.mxu0 %v1655
    %1946 = vmatprep.mubr.bf16.mxu0 %v994
    %1947 = vmatmul.mubr.bf16.gmra.mrb[0].mxu0 %v993
    %v1948 = vpop.f32.mrb[0].mxu0
    %v1949 = vadd.f32 %v1906, %v1948
    %v1950 = vpop.f32.mrb[0].mxu0
    %v1951 = vadd.f32 %v1908, %v1950
    %v1952 = vpop.f32.mrb[0].mxu0
    %v1953 = vadd.f32 %v1910, %v1952
    %v1954 = vpop.f32.mrb[0].mxu0
    %v1955 = vadd.f32 %v1912, %v1954
    %1956 = vdwg.mxu0
    %v1957 = vmax.f32 %v1863, 0.0
    %v1958 = vmax.f32 %v1865, 0.0
    %v1959 = vmax.f32 %v1949, 0.0
    %v1960 = vmax.f32 %v1951, 0.0
    %v1961 = vmax.f32 %v1867, 0.0
    %v1962 = vmax.f32 %v1869, 0.0
    %v1963 = vmax.f32 %v1953, 0.0
    %v1964 = vmax.f32 %v1955, 0.0
    %v1965 = vpack.c.bf16 %v1961, %v1957
    %v1966 = vpack.c.bf16 %v1962, %v1958
    %v1967 = vpack.c.bf16 %v1963, %v1959
    %v1968 = vpack.c.bf16 %v1964, %v1960
    %v1969 = vld [vmem:[#allocation9] sm:$0xff]
    %v1970 = vld [vmem:[#allocation9 + $0x8] sm:$0xff]
    %v1971 = vld [vmem:[#allocation9 + $0x10] sm:$0xff]
    %v1972 = vld [vmem:[#allocation9 + $0x18] sm:$0xff]
    %v1973 = vld [vmem:[#allocation9 + $0x20] sm:$0xff]
    %v1974 = vld [vmem:[#allocation9 + $0x28] sm:$0xff]
    %v1975 = vld [vmem:[#allocation9 + $0x30] sm:$0xff]
    %v1976 = vld [vmem:[#allocation9 + $0x38] sm:$0xff]
    %v1977 = vld [vmem:[#allocation9 + $0x40] sm:$0xff]
    %v1978 = vld [vmem:[#allocation9 + $0x48] sm:$0xff]
    %v1979 = vld [vmem:[#allocation9 + $0x50] sm:$0xff]
    %v1980 = vld [vmem:[#allocation9 + $0x58] sm:$0xff]
    %v1981 = vld [vmem:[#allocation9 + $0x60] sm:$0xff]
    %v1982 = vld [vmem:[#allocation9 + $0x68] sm:$0xff]
    %v1983 = vld [vmem:[#allocation9 + $0x70] sm:$0xff]
    %v1984 = vld [vmem:[#allocation9 + $0x78] sm:$0xff]
    %v1985 = vld [vmem:[#allocation9 + $0x80] sm:$0xff]
    %v1986 = vld [vmem:[#allocation9 + $0x88] sm:$0xff]
    %v1987 = vld [vmem:[#allocation9 + $0x90] sm:$0xff]
    %v1988 = vld [vmem:[#allocation9 + $0x98] sm:$0xff]
    %v1989 = vld [vmem:[#allocation9 + $0xa0] sm:$0xff]
    %v1990 = vld [vmem:[#allocation9 + $0xa8] sm:$0xff]
    %v1991 = vld [vmem:[#allocation9 + $0xb0] sm:$0xff]
    %v1992 = vld [vmem:[#allocation9 + $0xb8] sm:$0xff]
    %v1993 = vld [vmem:[#allocation9 + $0xc0] sm:$0xff]
    %v1994 = vld [vmem:[#allocation9 + $0xc8] sm:$0xff]
    %v1995 = vld [vmem:[#allocation9 + $0xd0] sm:$0xff]
    %v1996 = vld [vmem:[#allocation9 + $0xd8] sm:$0xff]
    %v1997 = vld [vmem:[#allocation9 + $0xe0] sm:$0xff]
    %v1998 = vld [vmem:[#allocation9 + $0xe8] sm:$0xff]
    %v1999 = vld [vmem:[#allocation9 + $0xf0] sm:$0xff]
    %v2000 = vld [vmem:[#allocation9 + $0xf8] sm:$0xff]
    %v2001 = vld [vmem:[#allocation9 + $0x100] sm:$0xff]
    %v2002 = vld [vmem:[#allocation9 + $0x108] sm:$0xff]
    %v2003 = vld [vmem:[#allocation9 + $0x110] sm:$0xff]
    %v2004 = vld [vmem:[#allocation9 + $0x118] sm:$0xff]
    %v2005 = vld [vmem:[#allocation9 + $0x120] sm:$0xff]
    %v2006 = vld [vmem:[#allocation9 + $0x128] sm:$0xff]
    %v2007 = vld [vmem:[#allocation9 + $0x130] sm:$0xff]
    %v2008 = vld [vmem:[#allocation9 + $0x138] sm:$0xff]
    %v2009 = vld [vmem:[#allocation9 + $0x140] sm:$0xff]
    %v2010 = vld [vmem:[#allocation9 + $0x148] sm:$0xff]
    %v2011 = vld [vmem:[#allocation9 + $0x150] sm:$0xff]
    %v2012 = vld [vmem:[#allocation9 + $0x158] sm:$0xff]
    %v2013 = vld [vmem:[#allocation9 + $0x160] sm:$0xff]
    %v2014 = vld [vmem:[#allocation9 + $0x168] sm:$0xff]
    %v2015 = vld [vmem:[#allocation9 + $0x170] sm:$0xff]
    %v2016 = vld [vmem:[#allocation9 + $0x178] sm:$0xff]
    %v2017 = vld [vmem:[#allocation9 + $0x180] sm:$0xff]
    %v2018 = vld [vmem:[#allocation9 + $0x188] sm:$0xff]
    %v2019 = vld [vmem:[#allocation9 + $0x190] sm:$0xff]
    %v2020 = vld [vmem:[#allocation9 + $0x198] sm:$0xff]
    %v2021 = vld [vmem:[#allocation9 + $0x1a0] sm:$0xff]
    %v2022 = vld [vmem:[#allocation9 + $0x1a8] sm:$0xff]
    %v2023 = vld [vmem:[#allocation9 + $0x1b0] sm:$0xff]
    %v2024 = vld [vmem:[#allocation9 + $0x1b8] sm:$0xff]
    %v2025 = vld [vmem:[#allocation9 + $0x1c0] sm:$0xff]
    %v2026 = vld [vmem:[#allocation9 + $0x1c8] sm:$0xff]
    %v2027 = vld [vmem:[#allocation9 + $0x1d0] sm:$0xff]
    %v2028 = vld [vmem:[#allocation9 + $0x1d8] sm:$0xff]
    %v2029 = vld [vmem:[#allocation9 + $0x1e0] sm:$0xff]
    %v2030 = vld [vmem:[#allocation9 + $0x1e8] sm:$0xff]
    %v2031 = vld [vmem:[#allocation9 + $0x1f0] sm:$0xff]
    %v2032 = vld [vmem:[#allocation9 + $0x1f8] sm:$0xff]
    %v2033 = vld [vmem:[%s10] sm:$0x3]
    %v2035 = vlaneseq
    %v2036 = vshrl.u32 %v2035, 7
    %v2037 = vsub.s32 0, %v2036
    %v2038 = vrot.slane %v2033, %v2037
    %v2039 = vlaneseq
    %v2040 = vshrl.u32 %v2039, 7
    %v2041 = vsub.s32 1, %v2040
    %v2042 = vrot.slane %v2033, %v2041
    %v2109 = vunpack.c.l.b16 %v1969
    %v2110 = vunpack.c.h.b16 %v1969
    %v2111 = vunpack.c.l.b16 %v1970
    %v2112 = vunpack.c.h.b16 %v1970
    %v2113 = vunpack.c.l.b16 %v1971
    %v2114 = vunpack.c.h.b16 %v1971
    %v2115 = vunpack.c.l.b16 %v1972
    %v2116 = vunpack.c.h.b16 %v1972
    %v2117 = vunpack.c.l.b16 %v1973
    %v2118 = vunpack.c.h.b16 %v1973
    %v2119 = vunpack.c.l.b16 %v1974
    %v2120 = vunpack.c.h.b16 %v1974
    %v2121 = vunpack.c.l.b16 %v1975
    %v2122 = vunpack.c.h.b16 %v1975
    %v2123 = vunpack.c.l.b16 %v1976
    %v2124 = vunpack.c.h.b16 %v1976
    %v2125 = vunpack.c.l.b16 %v1977
    %v2126 = vunpack.c.h.b16 %v1977
    %v2127 = vunpack.c.l.b16 %v1978
    %v2128 = vunpack.c.h.b16 %v1978
    %v2129 = vunpack.c.l.b16 %v1979
    %v2130 = vunpack.c.h.b16 %v1979
    %v2131 = vunpack.c.l.b16 %v1980
    %v2132 = vunpack.c.h.b16 %v1980
    %v2133 = vunpack.c.l.b16 %v1981
    %v2134 = vunpack.c.h.b16 %v1981
    %v2135 = vunpack.c.l.b16 %v1982
    %v2136 = vunpack.c.h.b16 %v1982
    %v2137 = vunpack.c.l.b16 %v1983
    %v2138 = vunpack.c.h.b16 %v1983
    %v2139 = vunpack.c.l.b16 %v1984
    %v2140 = vunpack.c.h.b16 %v1984
    %v2141 = vunpack.c.l.b16 %v1985
    %v2142 = vunpack.c.h.b16 %v1985
    %v2143 = vunpack.c.l.b16 %v1986
    %v2144 = vunpack.c.h.b16 %v1986
    %v2145 = vunpack.c.l.b16 %v1987
    %v2146 = vunpack.c.h.b16 %v1987
    %v2147 = vunpack.c.l.b16 %v1988
    %v2148 = vunpack.c.h.b16 %v1988
    %v2149 = vunpack.c.l.b16 %v1989
    %v2150 = vunpack.c.h.b16 %v1989
    %v2151 = vunpack.c.l.b16 %v1990
    %v2152 = vunpack.c.h.b16 %v1990
    %v2153 = vunpack.c.l.b16 %v1991
    %v2154 = vunpack.c.h.b16 %v1991
    %v2155 = vunpack.c.l.b16 %v1992
    %v2156 = vunpack.c.h.b16 %v1992
    %v2157 = vunpack.c.l.b16 %v1993
    %v2158 = vunpack.c.h.b16 %v1993
    %v2159 = vunpack.c.l.b16 %v1994
    %v2160 = vunpack.c.h.b16 %v1994
    %v2161 = vunpack.c.l.b16 %v1995
    %v2162 = vunpack.c.h.b16 %v1995
    %v2163 = vunpack.c.l.b16 %v1996
    %v2164 = vunpack.c.h.b16 %v1996
    %v2165 = vunpack.c.l.b16 %v1997
    %v2166 = vunpack.c.h.b16 %v1997
    %v2167 = vunpack.c.l.b16 %v1998
    %v2168 = vunpack.c.h.b16 %v1998
    %v2169 = vunpack.c.l.b16 %v1999
    %v2170 = vunpack.c.h.b16 %v1999
    %v2171 = vunpack.c.l.b16 %v2000
    %v2172 = vunpack.c.h.b16 %v2000
    %v2173 = vunpack.c.l.b16 %v2001
    %v2174 = vunpack.c.h.b16 %v2001
    %v2175 = vunpack.c.l.b16 %v2002
    %v2176 = vunpack.c.h.b16 %v2002
    %v2177 = vunpack.c.l.b16 %v2003
    %v2178 = vunpack.c.h.b16 %v2003
    %v2179 = vunpack.c.l.b16 %v2004
    %v2180 = vunpack.c.h.b16 %v2004
    %v2181 = vunpack.c.l.b16 %v2005
    %v2182 = vunpack.c.h.b16 %v2005
    %v2183 = vunpack.c.l.b16 %v2006
    %v2184 = vunpack.c.h.b16 %v2006
    %v2185 = vunpack.c.l.b16 %v2007
    %v2186 = vunpack.c.h.b16 %v2007
    %v2187 = vunpack.c.l.b16 %v2008
    %v2188 = vunpack.c.h.b16 %v2008
    %v2189 = vunpack.c.l.b16 %v2009
    %v2190 = vunpack.c.h.b16 %v2009
    %v2191 = vunpack.c.l.b16 %v2010
    %v2192 = vunpack.c.h.b16 %v2010
    %v2193 = vunpack.c.l.b16 %v2011
    %v2194 = vunpack.c.h.b16 %v2011
    %v2195 = vunpack.c.l.b16 %v2012
    %v2196 = vunpack.c.h.b16 %v2012
    %v2197 = vunpack.c.l.b16 %v2013
    %v2198 = vunpack.c.h.b16 %v2013
    %v2199 = vunpack.c.l.b16 %v2014
    %v2200 = vunpack.c.h.b16 %v2014
    %v2201 = vunpack.c.l.b16 %v2015
    %v2202 = vunpack.c.h.b16 %v2015
    %v2203 = vunpack.c.l.b16 %v2016
    %v2204 = vunpack.c.h.b16 %v2016
    %v2205 = vunpack.c.l.b16 %v2017
    %v2206 = vunpack.c.h.b16 %v2017
    %v2207 = vunpack.c.l.b16 %v2018
    %v2208 = vunpack.c.h.b16 %v2018
    %v2209 = vunpack.c.l.b16 %v2019
    %v2210 = vunpack.c.h.b16 %v2019
    %v2211 = vunpack.c.l.b16 %v2020
    %v2212 = vunpack.c.h.b16 %v2020
    %v2213 = vunpack.c.l.b16 %v2021
    %v2214 = vunpack.c.h.b16 %v2021
    %v2215 = vunpack.c.l.b16 %v2022
    %v2216 = vunpack.c.h.b16 %v2022
    %v2217 = vunpack.c.l.b16 %v2023
    %v2218 = vunpack.c.h.b16 %v2023
    %v2219 = vunpack.c.l.b16 %v2024
    %v2220 = vunpack.c.h.b16 %v2024
    %v2221 = vunpack.c.l.b16 %v2025
    %v2222 = vunpack.c.h.b16 %v2025
    %v2223 = vunpack.c.l.b16 %v2026
    %v2224 = vunpack.c.h.b16 %v2026
    %v2225 = vunpack.c.l.b16 %v2027
    %v2226 = vunpack.c.h.b16 %v2027
    %v2227 = vunpack.c.l.b16 %v2028
    %v2228 = vunpack.c.h.b16 %v2028
    %v2229 = vunpack.c.l.b16 %v2029
    %v2230 = vunpack.c.h.b16 %v2029
    %v2231 = vunpack.c.l.b16 %v2030
    %v2232 = vunpack.c.h.b16 %v2030
    %v2233 = vunpack.c.l.b16 %v2031
    %v2234 = vunpack.c.h.b16 %v2031
    %v2235 = vunpack.c.l.b16 %v2032
    %v2236 = vunpack.c.h.b16 %v2032
    %v2237 = vpack.c.b16 %v2111, %v2109
    %v2238 = vpack.c.b16 %v2112, %v2110
    %v2239 = vpack.c.b16 %v2115, %v2113
    %v2240 = vpack.c.b16 %v2116, %v2114
    %v2241 = vpack.c.b16 %v2119, %v2117
    %v2242 = vpack.c.b16 %v2120, %v2118
    %v2243 = vpack.c.b16 %v2123, %v2121
    %v2244 = vpack.c.b16 %v2124, %v2122
    %v2245 = vpack.c.b16 %v2127, %v2125
    %v2246 = vpack.c.b16 %v2128, %v2126
    %v2247 = vpack.c.b16 %v2131, %v2129
    %v2248 = vpack.c.b16 %v2132, %v2130
    %v2249 = vpack.c.b16 %v2135, %v2133
    %v2250 = vpack.c.b16 %v2136, %v2134
    %v2251 = vpack.c.b16 %v2139, %v2137
    %v2252 = vpack.c.b16 %v2140, %v2138
    %v2253 = vpack.c.b16 %v2143, %v2141
    %v2254 = vpack.c.b16 %v2144, %v2142
    %v2255 = vpack.c.b16 %v2147, %v2145
    %v2256 = vpack.c.b16 %v2148, %v2146
    %v2257 = vpack.c.b16 %v2151, %v2149
    %v2258 = vpack.c.b16 %v2152, %v2150
    %v2259 = vpack.c.b16 %v2155, %v2153
    %v2260 = vpack.c.b16 %v2156, %v2154
    %v2261 = vpack.c.b16 %v2159, %v2157
    %v2262 = vpack.c.b16 %v2160, %v2158
    %v2263 = vpack.c.b16 %v2163, %v2161
    %v2264 = vpack.c.b16 %v2164, %v2162
    %v2265 = vpack.c.b16 %v2167, %v2165
    %v2266 = vpack.c.b16 %v2168, %v2166
    %v2267 = vpack.c.b16 %v2171, %v2169
    %v2268 = vpack.c.b16 %v2172, %v2170
    %v2269 = vpack.c.b16 %v2175, %v2173
    %v2270 = vpack.c.b16 %v2176, %v2174
    %v2271 = vpack.c.b16 %v2179, %v2177
    %v2272 = vpack.c.b16 %v2180, %v2178
    %v2273 = vpack.c.b16 %v2183, %v2181
    %v2274 = vpack.c.b16 %v2184, %v2182
    %v2275 = vpack.c.b16 %v2187, %v2185
    %v2276 = vpack.c.b16 %v2188, %v2186
    %v2277 = vpack.c.b16 %v2191, %v2189
    %v2278 = vpack.c.b16 %v2192, %v2190
    %v2279 = vpack.c.b16 %v2195, %v2193
    %v2280 = vpack.c.b16 %v2196, %v2194
    %v2281 = vpack.c.b16 %v2199, %v2197
    %v2282 = vpack.c.b16 %v2200, %v2198
    %v2283 = vpack.c.b16 %v2203, %v2201
    %v2284 = vpack.c.b16 %v2204, %v2202
    %v2285 = vpack.c.b16 %v2207, %v2205
    %v2286 = vpack.c.b16 %v2208, %v2206
    %v2287 = vpack.c.b16 %v2211, %v2209
    %v2288 = vpack.c.b16 %v2212, %v2210
    %v2289 = vpack.c.b16 %v2215, %v2213
    %v2290 = vpack.c.b16 %v2216, %v2214
    %v2291 = vpack.c.b16 %v2219, %v2217
    %v2292 = vpack.c.b16 %v2220, %v2218
    %v2293 = vpack.c.b16 %v2223, %v2221
    %v2294 = vpack.c.b16 %v2224, %v2222
    %v2295 = vpack.c.b16 %v2227, %v2225
    %v2296 = vpack.c.b16 %v2228, %v2226
    %v2297 = vpack.c.b16 %v2231, %v2229
    %v2298 = vpack.c.b16 %v2232, %v2230
    %v2299 = vpack.c.b16 %v2235, %v2233
    %v2300 = vpack.c.b16 %v2236, %v2234
    %2365 = vmatprep.subr.bf16.mxu0 %v2238
    %2366 = vmatpush1.bf16.msra.mxu0 %v2237
    %2367 = vmatprep.subr.bf16.mxu0 %v2240
    %2368 = vmatpush1.bf16.msra.mxu0 %v2239
    %2369 = vmatprep.subr.bf16.mxu0 %v2242
    %2370 = vmatpush1.bf16.msra.mxu0 %v2241
    %2371 = vmatprep.subr.bf16.mxu0 %v2244
    %2372 = vmatpush1.bf16.msra.mxu0 %v2243
    %2373 = vmatprep.subr.bf16.mxu0 %v2246
    %2374 = vmatpush1.bf16.msra.mxu0 %v2245
    %2375 = vmatprep.subr.bf16.mxu0 %v2248
    %2376 = vmatpush1.bf16.msra.mxu0 %v2247
    %2377 = vmatprep.subr.bf16.mxu0 %v2250
    %2378 = vmatpush1.bf16.msra.mxu0 %v2249
    %2379 = vmatprep.subr.bf16.mxu0 %v2252
    %2380 = vmatpush1.bf16.msra.mxu0 %v2251
    %2381 = vmatprep.subr.bf16.mxu0 %v2254
    %2382 = vmatpush1.bf16.msra.mxu0 %v2253
    %2383 = vmatprep.subr.bf16.mxu0 %v2256
    %2384 = vmatpush1.bf16.msra.mxu0 %v2255
    %2385 = vmatprep.subr.bf16.mxu0 %v2258
    %2386 = vmatpush1.bf16.msra.mxu0 %v2257
    %2387 = vmatprep.subr.bf16.mxu0 %v2260
    %2388 = vmatpush1.bf16.msra.mxu0 %v2259
    %2389 = vmatprep.subr.bf16.mxu0 %v2262
    %2390 = vmatpush1.bf16.msra.mxu0 %v2261
    %2391 = vmatprep.subr.bf16.mxu0 %v2264
    %2392 = vmatpush1.bf16.msra.mxu0 %v2263
    %2393 = vmatprep.subr.bf16.mxu0 %v2266
    %2394 = vmatpush1.bf16.msra.mxu0 %v2265
    %2395 = vmatprep.subr.bf16.mxu0 %v2268
    %2396 = vmatpush1.bf16.msra.mxu0 %v2267
    %2397 = vmatprep.mubr.bf16.mxu0 %v1966
    %2398 = vmatmul.mubr.bf16.gmra.mrb[0].mxu0 %v1965
    %v2399 = vpop.f32.mrb[0].mxu0
    %v2400 = vadd.f32 %v2038, %v2399
    %v2401 = vpop.f32.mrb[0].mxu0
    %v2402 = vadd.f32 %v2042, %v2401
    %v2403 = vpop.f32.mrb[0].mxu0
    %v2404 = vadd.f32 %v2038, %v2403
    %v2405 = vpop.f32.mrb[0].mxu0
    %v2406 = vadd.f32 %v2042, %v2405
    %2407 = vdwg.mxu0
    %2408 = vmatprep.subr.bf16.mxu0 %v2270
    %2409 = vmatpush1.bf16.msra.mxu0 %v2269
    %2410 = vmatprep.subr.bf16.mxu0 %v2272
    %2411 = vmatpush1.bf16.msra.mxu0 %v2271
    %2412 = vmatprep.subr.bf16.mxu0 %v2274
    %2413 = vmatpush1.bf16.msra.mxu0 %v2273
    %2414 = vmatprep.subr.bf16.mxu0 %v2276
    %2415 = vmatpush1.bf16.msra.mxu0 %v2275
    %2416 = vmatprep.subr.bf16.mxu0 %v2278
    %2417 = vmatpush1.bf16.msra.mxu0 %v2277
    %2418 = vmatprep.subr.bf16.mxu0 %v2280
    %2419 = vmatpush1.bf16.msra.mxu0 %v2279
    %2420 = vmatprep.subr.bf16.mxu0 %v2282
    %2421 = vmatpush1.bf16.msra.mxu0 %v2281
    %2422 = vmatprep.subr.bf16.mxu0 %v2284
    %2423 = vmatpush1.bf16.msra.mxu0 %v2283
    %2424 = vmatprep.subr.bf16.mxu0 %v2286
    %2425 = vmatpush1.bf16.msra.mxu0 %v2285
    %2426 = vmatprep.subr.bf16.mxu0 %v2288
    %2427 = vmatpush1.bf16.msra.mxu0 %v2287
    %2428 = vmatprep.subr.bf16.mxu0 %v2290
    %2429 = vmatpush1.bf16.msra.mxu0 %v2289
    %2430 = vmatprep.subr.bf16.mxu0 %v2292
    %2431 = vmatpush1.bf16.msra.mxu0 %v2291
    %2432 = vmatprep.subr.bf16.mxu0 %v2294
    %2433 = vmatpush1.bf16.msra.mxu0 %v2293
    %2434 = vmatprep.subr.bf16.mxu0 %v2296
    %2435 = vmatpush1.bf16.msra.mxu0 %v2295
    %2436 = vmatprep.subr.bf16.mxu0 %v2298
    %2437 = vmatpush1.bf16.msra.mxu0 %v2297
    %2438 = vmatprep.subr.bf16.mxu0 %v2300
    %2439 = vmatpush1.bf16.msra.mxu0 %v2299
    %2440 = vmatprep.mubr.bf16.mxu0 %v1968
    %2441 = vmatmul.mubr.bf16.gmra.mrb[0].mxu0 %v1967
    %v2442 = vpop.f32.mrb[0].mxu0
    %v2443 = vadd.f32 %v2400, %v2442
    %v2444 = vpop.f32.mrb[0].mxu0
    %v2445 = vadd.f32 %v2402, %v2444
    %v2446 = vpop.f32.mrb[0].mxu0
    %v2447 = vadd.f32 %v2404, %v2446
    %v2448 = vpop.f32.mrb[0].mxu0
    %v2449 = vadd.f32 %v2406, %v2448
    %2450 = vdwg.mxu0
    %v2451 = vmax.f32 %v2443, 0.0
    %v2452 = vmax.f32 %v2445, 0.0
    %v2453 = vmax.f32 %v2447, 0.0
    %v2454 = vmax.f32 %v2449, 0.0
    %v2455 = vpack.c.bf16 %v2453, %v2451
    %v2456 = vpack.c.bf16 %v2454, %v2452
    %v2457 = vld [vmem:[#allocation10] sm:$0xff]
    %v2458 = vld [vmem:[#allocation10 + $0x8] sm:$0xff]
    %v2459 = vld [vmem:[#allocation10 + $0x10] sm:$0xff]
    %v2460 = vld [vmem:[#allocation10 + $0x18] sm:$0xff]
    %v2461 = vld [vmem:[#allocation10 + $0x20] sm:$0xff]
    %v2462 = vld [vmem:[#allocation10 + $0x28] sm:$0xff]
    %v2463 = vld [vmem:[#allocation10 + $0x30] sm:$0xff]
    %v2464 = vld [vmem:[#allocation10 + $0x38] sm:$0xff]
    %v2465 = vld [vmem:[#allocation10 + $0x40] sm:$0xff]
    %v2466 = vld [vmem:[#allocation10 + $0x48] sm:$0xff]
    %v2467 = vld [vmem:[#allocation10 + $0x50] sm:$0xff]
    %v2468 = vld [vmem:[#allocation10 + $0x58] sm:$0xff]
    %v2469 = vld [vmem:[#allocation10 + $0x60] sm:$0xff]
    %v2470 = vld [vmem:[#allocation10 + $0x68] sm:$0xff]
    %v2471 = vld [vmem:[#allocation10 + $0x70] sm:$0xff]
    %v2472 = vld [vmem:[#allocation10 + $0x78] sm:$0xff]
    %v2473 = vld [vmem:[#allocation10 + $0x80] sm:$0xff]
    %v2474 = vld [vmem:[#allocation10 + $0x88] sm:$0xff]
    %v2475 = vld [vmem:[#allocation10 + $0x90] sm:$0xff]
    %v2476 = vld [vmem:[#allocation10 + $0x98] sm:$0xff]
    %v2477 = vld [vmem:[#allocation10 + $0xa0] sm:$0xff]
    %v2478 = vld [vmem:[#allocation10 + $0xa8] sm:$0xff]
    %v2479 = vld [vmem:[#allocation10 + $0xb0] sm:$0xff]
    %v2480 = vld [vmem:[#allocation10 + $0xb8] sm:$0xff]
    %v2481 = vld [vmem:[#allocation10 + $0xc0] sm:$0xff]
    %v2482 = vld [vmem:[#allocation10 + $0xc8] sm:$0xff]
    %v2483 = vld [vmem:[#allocation10 + $0xd0] sm:$0xff]
    %v2484 = vld [vmem:[#allocation10 + $0xd8] sm:$0xff]
    %v2485 = vld [vmem:[#allocation10 + $0xe0] sm:$0xff]
    %v2486 = vld [vmem:[#allocation10 + $0xe8] sm:$0xff]
    %v2487 = vld [vmem:[#allocation10 + $0xf0] sm:$0xff]
    %v2488 = vld [vmem:[#allocation10 + $0xf8] sm:$0xff]
    %v2489 = vld [vmem:[%s12] sm:$0x3]
    %v2491 = vlaneseq
    %v2492 = vshrl.u32 %v2491, 7
    %v2493 = vsub.s32 0, %v2492
    %v2494 = vrot.slane %v2489, %v2493
    %v2495 = vlaneseq
    %v2496 = vshrl.u32 %v2495, 7
    %v2497 = vsub.s32 1, %v2496
    %v2498 = vrot.slane %v2489, %v2497
    %v2533 = vunpack.c.l.b16 %v2457
    %v2534 = vunpack.c.h.b16 %v2457
    %v2535 = vunpack.c.l.b16 %v2458
    %v2536 = vunpack.c.h.b16 %v2458
    %v2537 = vunpack.c.l.b16 %v2459
    %v2538 = vunpack.c.h.b16 %v2459
    %v2539 = vunpack.c.l.b16 %v2460
    %v2540 = vunpack.c.h.b16 %v2460
    %v2541 = vunpack.c.l.b16 %v2461
    %v2542 = vunpack.c.h.b16 %v2461
    %v2543 = vunpack.c.l.b16 %v2462
    %v2544 = vunpack.c.h.b16 %v2462
    %v2545 = vunpack.c.l.b16 %v2463
    %v2546 = vunpack.c.h.b16 %v2463
    %v2547 = vunpack.c.l.b16 %v2464
    %v2548 = vunpack.c.h.b16 %v2464
    %v2549 = vunpack.c.l.b16 %v2465
    %v2550 = vunpack.c.h.b16 %v2465
    %v2551 = vunpack.c.l.b16 %v2466
    %v2552 = vunpack.c.h.b16 %v2466
    %v2553 = vunpack.c.l.b16 %v2467
    %v2554 = vunpack.c.h.b16 %v2467
    %v2555 = vunpack.c.l.b16 %v2468
    %v2556 = vunpack.c.h.b16 %v2468
    %v2557 = vunpack.c.l.b16 %v2469
    %v2558 = vunpack.c.h.b16 %v2469
    %v2559 = vunpack.c.l.b16 %v2470
    %v2560 = vunpack.c.h.b16 %v2470
    %v2561 = vunpack.c.l.b16 %v2471
    %v2562 = vunpack.c.h.b16 %v2471
    %v2563 = vunpack.c.l.b16 %v2472
    %v2564 = vunpack.c.h.b16 %v2472
    %v2565 = vunpack.c.l.b16 %v2473
    %v2566 = vunpack.c.h.b16 %v2473
    %v2567 = vunpack.c.l.b16 %v2474
    %v2568 = vunpack.c.h.b16 %v2474
    %v2569 = vunpack.c.l.b16 %v2475
    %v2570 = vunpack.c.h.b16 %v2475
    %v2571 = vunpack.c.l.b16 %v2476
    %v2572 = vunpack.c.h.b16 %v2476
    %v2573 = vunpack.c.l.b16 %v2477
    %v2574 = vunpack.c.h.b16 %v2477
    %v2575 = vunpack.c.l.b16 %v2478
    %v2576 = vunpack.c.h.b16 %v2478
    %v2577 = vunpack.c.l.b16 %v2479
    %v2578 = vunpack.c.h.b16 %v2479
    %v2579 = vunpack.c.l.b16 %v2480
    %v2580 = vunpack.c.h.b16 %v2480
    %v2581 = vunpack.c.l.b16 %v2481
    %v2582 = vunpack.c.h.b16 %v2481
    %v2583 = vunpack.c.l.b16 %v2482
    %v2584 = vunpack.c.h.b16 %v2482
    %v2585 = vunpack.c.l.b16 %v2483
    %v2586 = vunpack.c.h.b16 %v2483
    %v2587 = vunpack.c.l.b16 %v2484
    %v2588 = vunpack.c.h.b16 %v2484
    %v2589 = vunpack.c.l.b16 %v2485
    %v2590 = vunpack.c.h.b16 %v2485
    %v2591 = vunpack.c.l.b16 %v2486
    %v2592 = vunpack.c.h.b16 %v2486
    %v2593 = vunpack.c.l.b16 %v2487
    %v2594 = vunpack.c.h.b16 %v2487
    %v2595 = vunpack.c.l.b16 %v2488
    %v2596 = vunpack.c.h.b16 %v2488
    %v2597 = vpack.c.b16 %v2535, %v2533
    %v2598 = vpack.c.b16 %v2536, %v2534
    %v2599 = vpack.c.b16 %v2539, %v2537
    %v2600 = vpack.c.b16 %v2540, %v2538
    %v2601 = vpack.c.b16 %v2543, %v2541
    %v2602 = vpack.c.b16 %v2544, %v2542
    %v2603 = vpack.c.b16 %v2547, %v2545
    %v2604 = vpack.c.b16 %v2548, %v2546
    %v2605 = vpack.c.b16 %v2551, %v2549
    %v2606 = vpack.c.b16 %v2552, %v2550
    %v2607 = vpack.c.b16 %v2555, %v2553
    %v2608 = vpack.c.b16 %v2556, %v2554
    %v2609 = vpack.c.b16 %v2559, %v2557
    %v2610 = vpack.c.b16 %v2560, %v2558
    %v2611 = vpack.c.b16 %v2563, %v2561
    %v2612 = vpack.c.b16 %v2564, %v2562
    %v2613 = vpack.c.b16 %v2567, %v2565
    %v2614 = vpack.c.b16 %v2568, %v2566
    %v2615 = vpack.c.b16 %v2571, %v2569
    %v2616 = vpack.c.b16 %v2572, %v2570
    %v2617 = vpack.c.b16 %v2575, %v2573
    %v2618 = vpack.c.b16 %v2576, %v2574
    %v2619 = vpack.c.b16 %v2579, %v2577
    %v2620 = vpack.c.b16 %v2580, %v2578
    %v2621 = vpack.c.b16 %v2583, %v2581
    %v2622 = vpack.c.b16 %v2584, %v2582
    %v2623 = vpack.c.b16 %v2587, %v2585
    %v2624 = vpack.c.b16 %v2588, %v2586
    %v2625 = vpack.c.b16 %v2591, %v2589
    %v2626 = vpack.c.b16 %v2592, %v2590
    %v2627 = vpack.c.b16 %v2595, %v2593
    %v2628 = vpack.c.b16 %v2596, %v2594
    %2661 = vmatprep.subr.bf16.mxu0 %v2598
    %2662 = vmatpush1.bf16.msra.mxu0 %v2597
    %2663 = vmatprep.subr.bf16.mxu0 %v2600
    %2664 = vmatpush1.bf16.msra.mxu0 %v2599
    %2665 = vmatprep.subr.bf16.mxu0 %v2602
    %2666 = vmatpush1.bf16.msra.mxu0 %v2601
    %2667 = vmatprep.subr.bf16.mxu0 %v2604
    %2668 = vmatpush1.bf16.msra.mxu0 %v2603
    %2669 = vmatprep.subr.bf16.mxu0 %v2606
    %2670 = vmatpush1.bf16.msra.mxu0 %v2605
    %2671 = vmatprep.subr.bf16.mxu0 %v2608
    %2672 = vmatpush1.bf16.msra.mxu0 %v2607
    %2673 = vmatprep.subr.bf16.mxu0 %v2610
    %2674 = vmatpush1.bf16.msra.mxu0 %v2609
    %2675 = vmatprep.subr.bf16.mxu0 %v2612
    %2676 = vmatpush1.bf16.msra.mxu0 %v2611
    %2677 = vmatprep.subr.bf16.mxu0 %v2614
    %2678 = vmatpush1.bf16.msra.mxu0 %v2613
    %2679 = vmatprep.subr.bf16.mxu0 %v2616
    %2680 = vmatpush1.bf16.msra.mxu0 %v2615
    %2681 = vmatprep.subr.bf16.mxu0 %v2618
    %2682 = vmatpush1.bf16.msra.mxu0 %v2617
    %2683 = vmatprep.subr.bf16.mxu0 %v2620
    %2684 = vmatpush1.bf16.msra.mxu0 %v2619
    %2685 = vmatprep.subr.bf16.mxu0 %v2622
    %2686 = vmatpush1.bf16.msra.mxu0 %v2621
    %2687 = vmatprep.subr.bf16.mxu0 %v2624
    %2688 = vmatpush1.bf16.msra.mxu0 %v2623
    %2689 = vmatprep.subr.bf16.mxu0 %v2626
    %2690 = vmatpush1.bf16.msra.mxu0 %v2625
    %2691 = vmatprep.subr.bf16.mxu0 %v2628
    %2692 = vmatpush1.bf16.msra.mxu0 %v2627
    %2693 = vmatprep.mubr.bf16.mxu0 %v2456
    %2694 = vmatmul.mubr.bf16.gmra.mrb[0].mxu0 %v2455
    %v2695 = vpop.f32.mrb[0].mxu0
    %v2696 = vadd.f32 %v2494, %v2695
    %v2697 = vpop.f32.mrb[0].mxu0
    %v2698 = vadd.f32 %v2498, %v2697
    %v2699 = vpop.f32.mrb[0].mxu0
    %v2700 = vadd.f32 %v2494, %v2699
    %v2701 = vpop.f32.mrb[0].mxu0
    %v2702 = vadd.f32 %v2498, %v2701
    %2703 = vdwg.mxu0
    %v2704 = vmax.f32 %v2696, 0.0
    %v2705 = vmax.f32 %v2698, 0.0
    %v2706 = vmax.f32 %v2700, 0.0
    %v2707 = vmax.f32 %v2702, 0.0
    %v2708 = vpack.c.bf16 %v2706, %v2704
    %v2709 = vpack.c.bf16 %v2707, %v2705
    %v2710 = vld [vmem:[#allocation12] sm:$0xf]
    %v2711 = vld [vmem:[#allocation12 + $0x4] sm:$0xf]
    %v2712 = vld [vmem:[#allocation12 + $0x8] sm:$0xf]
    %v2713 = vld [vmem:[#allocation12 + $0xc] sm:$0xf]
    %v2714 = vld [vmem:[#allocation12 + $0x10] sm:$0xf]
    %v2715 = vld [vmem:[#allocation12 + $0x14] sm:$0xf]
    %v2716 = vld [vmem:[#allocation12 + $0x18] sm:$0xf]
    %v2717 = vld [vmem:[#allocation12 + $0x1c] sm:$0xf]
    %v2718 = vld [vmem:[#allocation12 + $0x20] sm:$0xf]
    %v2719 = vld [vmem:[#allocation12 + $0x24] sm:$0xf]
    %v2720 = vld [vmem:[#allocation12 + $0x28] sm:$0xf]
    %v2721 = vld [vmem:[#allocation12 + $0x2c] sm:$0xf]
    %v2722 = vld [vmem:[#allocation12 + $0x30] sm:$0xf]
    %v2723 = vld [vmem:[#allocation12 + $0x34] sm:$0xf]
    %v2724 = vld [vmem:[#allocation12 + $0x38] sm:$0xf]
    %v2725 = vld [vmem:[#allocation12 + $0x3c] sm:$0xf]
    %v2726 = vld [vmem:[#allocation12 + $0x40] sm:$0xf]
    %v2727 = vld [vmem:[#allocation12 + $0x44] sm:$0xf]
    %v2728 = vld [vmem:[#allocation12 + $0x48] sm:$0xf]
    %v2729 = vld [vmem:[#allocation12 + $0x4c] sm:$0xf]
    %v2730 = vld [vmem:[#allocation12 + $0x50] sm:$0xf]
    %v2731 = vld [vmem:[#allocation12 + $0x54] sm:$0xf]
    %v2732 = vld [vmem:[#allocation12 + $0x58] sm:$0xf]
    %v2733 = vld [vmem:[#allocation12 + $0x5c] sm:$0xf]
    %v2734 = vld [vmem:[#allocation12 + $0x60] sm:$0xf]
    %v2735 = vld [vmem:[#allocation12 + $0x64] sm:$0xf]
    %v2736 = vld [vmem:[#allocation12 + $0x68] sm:$0xf]
    %v2737 = vld [vmem:[#allocation12 + $0x6c] sm:$0xf]
    %v2738 = vld [vmem:[#allocation12 + $0x70] sm:$0xf]
    %v2739 = vld [vmem:[#allocation12 + $0x74] sm:$0xf]
    %v2740 = vld [vmem:[#allocation12 + $0x78] sm:$0xf]
    %v2741 = vld [vmem:[#allocation12 + $0x7c] sm:$0xf]
    %v2742 = vld [vmem:[%s14] sm:$0x1]
    %v2744 = vlaneseq
    %v2745 = vshrl.u32 %v2744, 7
    %v2746 = vsub.s32 0, %v2745
    %v2747 = vrot.slane %v2742, %v2746
    %v2781 = vunpack.c.l.b16 %v2710
    %v2782 = vunpack.c.l.b16 %v2711
    %v2783 = vunpack.c.l.b16 %v2712
    %v2784 = vunpack.c.l.b16 %v2713
    %v2785 = vunpack.c.l.b16 %v2714
    %v2786 = vunpack.c.l.b16 %v2715
    %v2787 = vunpack.c.l.b16 %v2716
    %v2788 = vunpack.c.l.b16 %v2717
    %v2789 = vunpack.c.l.b16 %v2718
    %v2790 = vunpack.c.l.b16 %v2719
    %v2791 = vunpack.c.l.b16 %v2720
    %v2792 = vunpack.c.l.b16 %v2721
    %v2793 = vunpack.c.l.b16 %v2722
    %v2794 = vunpack.c.l.b16 %v2723
    %v2795 = vunpack.c.l.b16 %v2724
    %v2796 = vunpack.c.l.b16 %v2725
    %v2797 = vunpack.c.l.b16 %v2726
    %v2798 = vunpack.c.l.b16 %v2727
    %v2799 = vunpack.c.l.b16 %v2728
    %v2800 = vunpack.c.l.b16 %v2729
    %v2801 = vunpack.c.l.b16 %v2730
    %v2802 = vunpack.c.l.b16 %v2731
    %v2803 = vunpack.c.l.b16 %v2732
    %v2804 = vunpack.c.l.b16 %v2733
    %v2805 = vunpack.c.l.b16 %v2734
    %v2806 = vunpack.c.l.b16 %v2735
    %v2807 = vunpack.c.l.b16 %v2736
    %v2808 = vunpack.c.l.b16 %v2737
    %v2809 = vunpack.c.l.b16 %v2738
    %v2810 = vunpack.c.l.b16 %v2739
    %v2811 = vunpack.c.l.b16 %v2740
    %v2812 = vunpack.c.l.b16 %v2741
    %v2813 = vpack.c.b16 %v2782, %v2781
    %v2814 = vpack.c.b16 %v2784, %v2783
    %v2815 = vpack.c.b16 %v2786, %v2785
    %v2816 = vpack.c.b16 %v2788, %v2787
    %v2817 = vpack.c.b16 %v2790, %v2789
    %v2818 = vpack.c.b16 %v2792, %v2791
    %v2819 = vpack.c.b16 %v2794, %v2793
    %v2820 = vpack.c.b16 %v2796, %v2795
    %v2821 = vpack.c.b16 %v2798, %v2797
    %v2822 = vpack.c.b16 %v2800, %v2799
    %v2823 = vpack.c.b16 %v2802, %v2801
    %v2824 = vpack.c.b16 %v2804, %v2803
    %v2825 = vpack.c.b16 %v2806, %v2805
    %v2826 = vpack.c.b16 %v2808, %v2807
    %v2827 = vpack.c.b16 %v2810, %v2809
    %v2828 = vpack.c.b16 %v2812, %v2811
    %2845 = vmatprep.subr.bf16.mxu0 0
    %2846 = vmatpush1.bf16.msra.mxu0 %v2813
    %2847 = vmatprep.subr.bf16.mxu0 0
    %2848 = vmatpush1.bf16.msra.mxu0 %v2814
    %2849 = vmatprep.subr.bf16.mxu0 0
    %2850 = vmatpush1.bf16.msra.mxu0 %v2815
    %2851 = vmatprep.subr.bf16.mxu0 0
    %2852 = vmatpush1.bf16.msra.mxu0 %v2816
    %2853 = vmatprep.subr.bf16.mxu0 0
    %2854 = vmatpush1.bf16.msra.mxu0 %v2817
    %2855 = vmatprep.subr.bf16.mxu0 0
    %2856 = vmatpush1.bf16.msra.mxu0 %v2818
    %2857 = vmatprep.subr.bf16.mxu0 0
    %2858 = vmatpush1.bf16.msra.mxu0 %v2819
    %2859 = vmatprep.subr.bf16.mxu0 0
    %2860 = vmatpush1.bf16.msra.mxu0 %v2820
    %2861 = vmatprep.subr.bf16.mxu0 0
    %2862 = vmatpush1.bf16.msra.mxu0 %v2821
    %2863 = vmatprep.subr.bf16.mxu0 0
    %2864 = vmatpush1.bf16.msra.mxu0 %v2822
    %2865 = vmatprep.subr.bf16.mxu0 0
    %2866 = vmatpush1.bf16.msra.mxu0 %v2823
    %2867 = vmatprep.subr.bf16.mxu0 0
    %2868 = vmatpush1.bf16.msra.mxu0 %v2824
    %2869 = vmatprep.subr.bf16.mxu0 0
    %2870 = vmatpush1.bf16.msra.mxu0 %v2825
    %2871 = vmatprep.subr.bf16.mxu0 0
    %2872 = vmatpush1.bf16.msra.mxu0 %v2826
    %2873 = vmatprep.subr.bf16.mxu0 0
    %2874 = vmatpush1.bf16.msra.mxu0 %v2827
    %2875 = vmatprep.subr.bf16.mxu0 0
    %2876 = vmatpush1.bf16.msra.mxu0 %v2828
    %2877 = vmatprep.mubr.bf16.mxu0 %v2709
    %2878 = vmatmul.mubr.bf16.gmra.mrb[0].mxu0 %v2708
    %v2879 = vpop.f32.mrb[0].mxu0
    %v2880 = vadd.f32 %v2747, %v2879
    %v2881 = vpop.f32.mrb[0].mxu0
    %v2882 = vpop.f32.mrb[0].mxu0
    %v2883 = vadd.f32 %v2747, %v2882
    %v2884 = vpop.f32.mrb[0].mxu0
    %2885 = vdwg.mxu0
    %2886 = vadd.xlane.f32.xlu0 %v2880
    %v2887 = vpop.xlane.xlu0 %2886
    %2888 = vadd.xlane.f32.xlu0 %v2883
    %v2889 = vpop.xlane.xlu0 %2888
    %v2890 = vsub.f32 %v2887, %v2880
    %v2891 = vsub.f32 %v2889, %v2883
    %v2892 = vmul.f32 %v2890, 0.125
    %v2893 = vmul.f32 %v2891, 0.125
    %v2894 = vsub.f32 %v2880, %v2892
    %v2895 = vsub.f32 %v2883, %v2893
    %2897 = vset.pattern.permute.xlu0 0
    %2898 = vperm.xlu0 %2897, %v2894
    %v2899 = vpop.permute.xlu0 %2898
    %2902 = vset.pattern.permute.xlu0 0
    %2903 = vperm.xlu0 %2902, %v2895
    %v2904 = vpop.permute.xlu0 %2903
    %v2906 = vadd.f32 %v2880, %v2899
    %v2907 = vadd.f32 %v2883, %v2904
    %2908 = vst [vmem:[%s15] sm:$0xff] %v2906
    %2909 = vst [vmem:[%s15 + $0x8] sm:$0xff] %v2907
    // Predicated region
    $region90: #{dueling_dqn_forward.1} parent=1 // pred_check
      _
    $region91: #{dueling_dqn_forward.1} parent=1 // pred_check_branch
      %2911 = sbr.rel (0) target = $region93
    $region92: #{dueling_dqn_forward.1} parent=1 // pred_region
      _
    $region93: #{dueling_dqn_forward.1} parent=1 // pred_fallthru
      _
    // Predicated region
    $region94: #{dueling_dqn_forward.1} parent=1 // pred_check
      _
    $region95: #{dueling_dqn_forward.1} parent=1 // pred_check_branch
      %2913 = sbr.rel (0) target = $region97
    $region96: #{dueling_dqn_forward.1} parent=1 // pred_region
      _
    $region97: #{dueling_dqn_forward.1} parent=1 // pred_fallthru
      _
    %2914 = vsyncpa [#allocation3], 1
    %2915 = vsyncpa [#allocation5], 1
    %2916 = vsyncpa [#allocation8], 1
    %2917 = vsyncpa [#allocation11], 1

</llo_original>
